<compile_context>
chip_gen: v7x
topology: tpu7x:2x2x1
jax: 0.10.0
libtpu: 0.0.40
codegen_flags: <defaults>
</compile_context>

<pallas_src>
import jax
import jax.numpy as jnp
from jax.experimental import pallas as pl
from jax.experimental.pallas import tpu as pltpu


def _softplus(h):
    # PyTorch nn.Softplus (beta=1, threshold=20): x for x > 20, else log(1+exp(x)).
    safe = jnp.minimum(h, 20.0)
    return jnp.where(h > 20.0, h, jnp.log(1.0 + jnp.exp(safe)))


def _encoder_kernel(x_ref, w1_ref, b1_ref, w21_ref, b21_ref, w22_ref, b22_ref,
                    zloc_ref, zscale_ref):
    x = x_ref[...]
    # fc1 + softplus
    h = jnp.dot(x, w1_ref[...], preferred_element_type=jnp.float32) + b1_ref[...]
    h = _softplus(h).astype(x.dtype)
    # fc21 -> z_loc
    zloc = jnp.dot(h, w21_ref[...], preferred_element_type=jnp.float32) + b21_ref[...]
    # fc22 -> exp -> z_scale
    zscale = jnp.exp(
        jnp.dot(h, w22_ref[...], preferred_element_type=jnp.float32) + b22_ref[...]
    )
    zloc_ref[...] = zloc.astype(zloc_ref.dtype)
    zscale_ref[...] = zscale.astype(zscale_ref.dtype)


def _round_up(n, m):
    return ((n + m - 1) // m) * m


def encoder_forward(x, w1, b1, w21, b21, w22, b22, *, tile_b: int = 256):
    """Fused encoder forward.

    Args:
      x:   (..., input_dim) input, reshaped to (B, input_dim) like the PyTorch module.
      w1:  (input_dim, hidden_dim)   b1:  (hidden_dim,)
      w21: (hidden_dim, z_dim)       b21: (z_dim,)
      w22: (hidden_dim, z_dim)       b22: (z_dim,)
    Returns:
      (z_loc, z_scale), each (B, z_dim).
    """
    input_dim, hidden_dim = w1.shape
    z_dim = w21.shape[1]

    x2 = x.reshape(-1, input_dim)
    B = x2.shape[0]

    # Bounded batch tile (multiple of 8 sublanes); pad batch up to a tile multiple.
    tb = min(tile_b, _round_up(B, 8))
    B_pad = _round_up(B, tb)
    if B_pad != B:
        x2 = jnp.pad(x2, ((0, B_pad - B), (0, 0)))
    grid = (B_pad // tb,)

    b1r = b1.reshape(1, hidden_dim)
    b21r = b21.reshape(1, z_dim)
    b22r = b22.reshape(1, z_dim)

    z_loc, z_scale = pl.pallas_call(
        _encoder_kernel,
        out_shape=(
            jax.ShapeDtypeStruct((B_pad, z_dim), x2.dtype),
            jax.ShapeDtypeStruct((B_pad, z_dim), x2.dtype),
        ),
        grid=grid,
        in_specs=[
            pl.BlockSpec((tb, input_dim), lambda i: (i, 0)),        # x tile
            pl.BlockSpec((input_dim, hidden_dim), lambda i: (0, 0)),  # W1 (resident)
            pl.BlockSpec((1, hidden_dim), lambda i: (0, 0)),          # b1
            pl.BlockSpec((hidden_dim, z_dim), lambda i: (0, 0)),      # W21
            pl.BlockSpec((1, z_dim), lambda i: (0, 0)),               # b21
            pl.BlockSpec((hidden_dim, z_dim), lambda i: (0, 0)),      # W22
            pl.BlockSpec((1, z_dim), lambda i: (0, 0)),               # b22
        ],
        out_specs=(
            pl.BlockSpec((tb, z_dim), lambda i: (i, 0)),
            pl.BlockSpec((tb, z_dim), lambda i: (i, 0)),
        ),
        compiler_params=pltpu.CompilerParams(
            dimension_semantics=("parallel",),
        ),
    )(x2, w1, b1r, w21, b21r, w22, b22r)

    if B_pad != B:
        z_loc = z_loc[:B]
        z_scale = z_scale[:B]
    return z_loc, z_scale


if __name__ == "__main__":
    # Make kernel and reference matmuls use the same (high) f32 precision.
    jax.config.update("jax_default_matmul_precision", "highest")

    key = jax.random.PRNGKey(0)
    batch, input_dim, hidden_dim, z_dim = 2, 32, 32, 16
    ks = jax.random.split(key, 7)

    x = jax.random.normal(ks[0], (batch, input_dim), dtype=jnp.float32)
    w1 = jax.random.normal(ks[1], (input_dim, hidden_dim), jnp.float32) * 0.1
    b1 = jax.random.normal(ks[2], (hidden_dim,), jnp.float32) * 0.1
    w21 = jax.random.normal(ks[3], (hidden_dim, z_dim), jnp.float32) * 0.1
    b21 = jax.random.normal(ks[4], (z_dim,), jnp.float32) * 0.1
    w22 = jax.random.normal(ks[5], (hidden_dim, z_dim), jnp.float32) * 0.1
    b22 = jax.random.normal(ks[6], (z_dim,), jnp.float32) * 0.1

    z_loc, z_scale = encoder_forward(x, w1, b1, w21, b21, w22, b22)
    jax.block_until_ready((z_loc, z_scale))

    # Pure-JAX reference (same math as the PyTorch module).
    x2 = x.reshape(-1, input_dim)
    hidden = jax.nn.softplus(x2 @ w1 + b1)
    zloc_ref = hidden @ w21 + b21
    zscale_ref = jnp.exp(hidden @ w22 + b22)

    assert z_loc.shape == (batch, z_dim) and z_scale.shape == (batch, z_dim)
    assert z_loc.dtype == x.dtype and z_scale.dtype == x.dtype
    assert bool(jnp.allclose(z_loc, zloc_ref, atol=1e-4, rtol=1e-4))
    assert bool(jnp.allclose(z_scale, zscale_ref, atol=1e-4, rtol=1e-4))
    print("KERNEL_OK")
</pallas_src>

<mosaic_0001>
module attributes {stable_mosaic.version = 11 : i64} {
  func.func @_encoder_kernel(%arg0: i32, %arg1: memref<8x32xf32, #tpu.memory_space<vmem>>, %arg2: memref<32x32xf32, #tpu.memory_space<vmem>>, %arg3: memref<1x32xf32, #tpu.memory_space<vmem>>, %arg4: memref<32x16xf32, #tpu.memory_space<vmem>>, %arg5: memref<1x16xf32, #tpu.memory_space<vmem>>, %arg6: memref<32x16xf32, #tpu.memory_space<vmem>>, %arg7: memref<1x16xf32, #tpu.memory_space<vmem>>, %arg8: memref<8x16xf32, #tpu.memory_space<vmem>>, %arg9: memref<8x16xf32, #tpu.memory_space<vmem>>) attributes {dimension_semantics = [#tpu.dimension_semantics<parallel>], iteration_bounds = array<i64: 1>, scalar_prefetch = 0 : i64, scratch_operands = 0 : i64, tpu.core_type = #tpu.core_type<tc>, window_params = [{transform_indices = @transform_0, window_bounds = array<i64: 8, 32>}, {pipeline_mode = #tpu.pipeline_mode<synchronous>, transform_indices = @transform_1, window_bounds = array<i64: 32, 32>}, {pipeline_mode = #tpu.pipeline_mode<synchronous>, transform_indices = @transform_2, window_bounds = array<i64: 1, 32>}, {pipeline_mode = #tpu.pipeline_mode<synchronous>, transform_indices = @transform_3, window_bounds = array<i64: 32, 16>}, {pipeline_mode = #tpu.pipeline_mode<synchronous>, transform_indices = @transform_4, window_bounds = array<i64: 1, 16>}, {pipeline_mode = #tpu.pipeline_mode<synchronous>, transform_indices = @transform_5, window_bounds = array<i64: 32, 16>}, {pipeline_mode = #tpu.pipeline_mode<synchronous>, transform_indices = @transform_6, window_bounds = array<i64: 1, 16>}, {transform_indices = @transform_7, window_bounds = array<i64: 8, 16>}, {transform_indices = @transform_8, window_bounds = array<i64: 8, 16>}]} {
    %c0 = arith.constant 0 : index
    %c0_0 = arith.constant 0 : index
    %0 = vector.load %arg1[%c0, %c0_0] : memref<8x32xf32, #tpu.memory_space<vmem>>, vector<8x32xf32>
    %c0_1 = arith.constant 0 : index
    %c0_2 = arith.constant 0 : index
    %1 = vector.load %arg2[%c0_1, %c0_2] : memref<32x32xf32, #tpu.memory_space<vmem>>, vector<32x32xf32>
    %cst = arith.constant dense<0.000000e+00> : vector<8x32xf32>
    %2 = tpu.matmul %0, %1, %cst {dimension_numbers = #tpu.dot_dimension_numbers<[1], [0], [0], [1], [0, 0, 1, 1], [], []>, precision = #tpu.contract_precision<fp32>} : vector<8x32xf32>, vector<32x32xf32>, vector<8x32xf32> -> vector<8x32xf32>
    %c0_3 = arith.constant 0 : index
    %c0_4 = arith.constant 0 : index
    %3 = vector.load %arg3[%c0_3, %c0_4] : memref<1x32xf32, #tpu.memory_space<vmem>>, vector<1x32xf32>
    %4 = vector.broadcast %3 : vector<1x32xf32> to vector<8x32xf32>
    %5 = arith.addf %2, %4 : vector<8x32xf32>
    %cst_5 = arith.constant 2.000000e+01 : f32
    %6 = vector.broadcast %cst_5 : f32 to vector<8x32xf32>
    %7 = arith.minimumf %5, %6 : vector<8x32xf32>
    %cst_6 = arith.constant 2.000000e+01 : f32
    %8 = vector.broadcast %cst_6 : f32 to vector<8x32xf32>
    %9 = arith.cmpf ogt, %5, %8 : vector<8x32xf32>
    %10 = math.exp %7 : vector<8x32xf32>
    %cst_7 = arith.constant 1.000000e+00 : f32
    %11 = vector.broadcast %cst_7 : f32 to vector<8x32xf32>
    %12 = arith.addf %11, %10 : vector<8x32xf32>
    %13 = math.log %12 : vector<8x32xf32>
    %14 = arith.select %9, %5, %13 : vector<8x32xi1>, vector<8x32xf32>
    %c0_8 = arith.constant 0 : index
    %c0_9 = arith.constant 0 : index
    %15 = vector.load %arg4[%c0_8, %c0_9] : memref<32x16xf32, #tpu.memory_space<vmem>>, vector<32x16xf32>
    %cst_10 = arith.constant dense<0.000000e+00> : vector<8x16xf32>
    %16 = tpu.matmul %14, %15, %cst_10 {dimension_numbers = #tpu.dot_dimension_numbers<[1], [0], [0], [1], [0, 0, 1, 1], [], []>, precision = #tpu.contract_precision<fp32>} : vector<8x32xf32>, vector<32x16xf32>, vector<8x16xf32> -> vector<8x16xf32>
    %c0_11 = arith.constant 0 : index
    %c0_12 = arith.constant 0 : index
    %17 = vector.load %arg5[%c0_11, %c0_12] : memref<1x16xf32, #tpu.memory_space<vmem>>, vector<1x16xf32>
    %18 = vector.broadcast %17 : vector<1x16xf32> to vector<8x16xf32>
    %19 = arith.addf %16, %18 : vector<8x16xf32>
    %c0_13 = arith.constant 0 : index
    %c0_14 = arith.constant 0 : index
    %20 = vector.load %arg6[%c0_13, %c0_14] : memref<32x16xf32, #tpu.memory_space<vmem>>, vector<32x16xf32>
    %cst_15 = arith.constant dense<0.000000e+00> : vector<8x16xf32>
    %21 = tpu.matmul %14, %20, %cst_15 {dimension_numbers = #tpu.dot_dimension_numbers<[1], [0], [0], [1], [0, 0, 1, 1], [], []>, precision = #tpu.contract_precision<fp32>} : vector<8x32xf32>, vector<32x16xf32>, vector<8x16xf32> -> vector<8x16xf32>
    %c0_16 = arith.constant 0 : index
    %c0_17 = arith.constant 0 : index
    %22 = vector.load %arg7[%c0_16, %c0_17] : memref<1x16xf32, #tpu.memory_space<vmem>>, vector<1x16xf32>
    %23 = vector.broadcast %22 : vector<1x16xf32> to vector<8x16xf32>
    %24 = arith.addf %21, %23 : vector<8x16xf32>
    %25 = math.exp %24 : vector<8x16xf32>
    %c0_18 = arith.constant 0 : index
    %c0_19 = arith.constant 0 : index
    %26 = vector.load %arg8[%c0_18, %c0_19] : memref<8x16xf32, #tpu.memory_space<vmem>>, vector<8x16xf32>
    tpu.vector_store %arg8[%c0_18, %c0_19], %19 {strides = array<i32>} : memref<8x16xf32, #tpu.memory_space<vmem>>, vector<8x16xf32>,
    %c0_20 = arith.constant 0 : index
    %c0_21 = arith.constant 0 : index
    %27 = vector.load %arg9[%c0_20, %c0_21] : memref<8x16xf32, #tpu.memory_space<vmem>>, vector<8x16xf32>
    tpu.vector_store %arg9[%c0_20, %c0_21], %25 {strides = array<i32>} : memref<8x16xf32, #tpu.memory_space<vmem>>, vector<8x16xf32>,
    return
  }
  func.func @transform_0(%arg0: i32) -> (i32, i32) {
    %c0_i32 = arith.constant 0 : i32
    %c0_i32_0 = arith.constant 0 : i32
    return %arg0, %c0_i32 : i32, i32
  }
  func.func @transform_1(%arg0: i32) -> (i32, i32) {
    %c0_i32 = arith.constant 0 : i32
    %c0_i32_0 = arith.constant 0 : i32
    %c0_i32_1 = arith.constant 0 : i32
    return %c0_i32, %c0_i32_0 : i32, i32
  }
  func.func @transform_2(%arg0: i32) -> (i32, i32) {
    %c0_i32 = arith.constant 0 : i32
    %c0_i32_0 = arith.constant 0 : i32
    %c0_i32_1 = arith.constant 0 : i32
    return %c0_i32, %c0_i32_0 : i32, i32
  }
  func.func @transform_3(%arg0: i32) -> (i32, i32) {
    %c0_i32 = arith.constant 0 : i32
    %c0_i32_0 = arith.constant 0 : i32
    %c0_i32_1 = arith.constant 0 : i32
    return %c0_i32, %c0_i32_0 : i32, i32
  }
  func.func @transform_4(%arg0: i32) -> (i32, i32) {
    %c0_i32 = arith.constant 0 : i32
    %c0_i32_0 = arith.constant 0 : i32
    %c0_i32_1 = arith.constant 0 : i32
    return %c0_i32, %c0_i32_0 : i32, i32
  }
  func.func @transform_5(%arg0: i32) -> (i32, i32) {
    %c0_i32 = arith.constant 0 : i32
    %c0_i32_0 = arith.constant 0 : i32
    %c0_i32_1 = arith.constant 0 : i32
    return %c0_i32, %c0_i32_0 : i32, i32
  }
  func.func @transform_6(%arg0: i32) -> (i32, i32) {
    %c0_i32 = arith.constant 0 : i32
    %c0_i32_0 = arith.constant 0 : i32
    %c0_i32_1 = arith.constant 0 : i32
    return %c0_i32, %c0_i32_0 : i32, i32
  }
  func.func @transform_7(%arg0: i32) -> (i32, i32) {
    %c0_i32 = arith.constant 0 : i32
    %c0_i32_0 = arith.constant 0 : i32
    return %arg0, %c0_i32 : i32, i32
  }
  func.func @transform_8(%arg0: i32) -> (i32, i32) {
    %c0_i32 = arith.constant 0 : i32
    %c0_i32_0 = arith.constant 0 : i32
    return %arg0, %c0_i32 : i32, i32
  }
}

</mosaic_0001>

<llo_original>
// kernel: tpu_custom_call.1
$region0: #{tpu_custom_call.1}
  #allocation0 [shape = 'u32[]', space=smem, size = 0x4, offset = 0x4, fixed_abs, tag = 'smem constant byte address 0x4 - core index']
  #allocation1 [shape = 'u32[144,128]{1,0:T(1,128)}', space=vmem, size = 0x12000, scoped, tag = 'internal scratch']
  %s0 = inlined_call_operand.vmem [shape: f32[8,32], index: 0, kind: input, shape index: {}]
  %s1 = inlined_call_operand.vmem [shape: f32[32,32], index: 1, kind: input, shape index: {}]
  %s2 = inlined_call_operand.vmem [shape: f32[1,32], index: 2, kind: input, shape index: {}]
  %s3 = inlined_call_operand.vmem [shape: f32[32,16], index: 3, kind: input, shape index: {}]
  %s4 = inlined_call_operand.vmem [shape: f32[1,16], index: 4, kind: input, shape index: {}]
  %s5 = inlined_call_operand.vmem [shape: f32[32,16], index: 5, kind: input, shape index: {}]
  %s6 = inlined_call_operand.vmem [shape: f32[1,16], index: 6, kind: input, shape index: {}]
  %s7 = inlined_call_operand.hbm [shape: f32[8,16], index: 7, kind: output, shape index: {0}]
  %s8 = inlined_call_operand.hbm [shape: f32[8,16], index: 8, kind: output, shape index: {1}]
  %9 = xla_tuple %s7, %s8
  %s10 = sld [smem:[#allocation0]]
  $region46: #{tpu_custom_call.1} parent=0
    _
  %s12 = ssub.s32 1, %s10
  %s13 = scalar_select 0, %s12, %s10
  $region1: #{tpu_custom_call.1} parent=0
    #allocation2 [shape = 'u8[4096]{0}', space=vmem, size = 0x1000, scoped, tag = 'output window, operand 0, single buffered']
    #allocation3 [shape = 's32[1]{0}', space=sflag, size = 0x4, scoped, tag = 'scoped memory for tpu_custom_call.1']
    #allocation4 [shape = 'u8[4096]{0}', space=vmem, size = 0x1000, scoped, tag = 'output window, operand 1, single buffered']
    #allocation5 [shape = 's32[1]{0}', space=sflag, size = 0x4, scoped, tag = 'scoped memory for tpu_custom_call.1']
    %14 = vsyncpa [#allocation3], 0
    %15 = vsyncpa [#allocation5], 0
    // Predicated region
    $region2: #{tpu_custom_call.1} parent=1 // pred_check
      _
    $region3: #{tpu_custom_call.1} parent=1 // pred_check_branch
      %17 = sbr.rel (0) target = $region5
    $region4: #{tpu_custom_call.1} parent=1 // pred_region
      _
    $region5: #{tpu_custom_call.1} parent=1 // pred_fallthru
      _
    // Predicated region
    $region6: #{tpu_custom_call.1} parent=1 // pred_check
      _
    $region7: #{tpu_custom_call.1} parent=1 // pred_check_branch
      %19 = sbr.rel (0) target = $region9
    $region8: #{tpu_custom_call.1} parent=1 // pred_region
      _
    $region9: #{tpu_custom_call.1} parent=1 // pred_fallthru
      _
    // Predicated region
    $region10: #{tpu_custom_call.1} parent=1 // pred_check
      _
    $region11: #{tpu_custom_call.1} parent=1 // pred_check_branch
      %21 = sbr.rel (0) target = $region13
    $region12: #{tpu_custom_call.1} parent=1 // pred_region
      _
    $region13: #{tpu_custom_call.1} parent=1 // pred_fallthru
      _
    // Predicated region
    $region14: #{tpu_custom_call.1} parent=1 // pred_check
      _
    $region15: #{tpu_custom_call.1} parent=1 // pred_check_branch
      %23 = sbr.rel (0) target = $region17
    $region16: #{tpu_custom_call.1} parent=1 // pred_region
      _
    $region17: #{tpu_custom_call.1} parent=1 // pred_fallthru
      _
    // Predicated region
    $region18: #{tpu_custom_call.1} parent=1 // pred_check
      _
    $region19: #{tpu_custom_call.1} parent=1 // pred_check_branch
      %25 = sbr.rel (0) target = $region21
    $region20: #{tpu_custom_call.1} parent=1 // pred_region
      _
    $region21: #{tpu_custom_call.1} parent=1 // pred_fallthru
      _
    // Predicated region
    $region22: #{tpu_custom_call.1} parent=1 // pred_check
      _
    $region23: #{tpu_custom_call.1} parent=1 // pred_check_branch
      %27 = sbr.rel (0) target = $region25
    $region24: #{tpu_custom_call.1} parent=1 // pred_region
      _
    $region25: #{tpu_custom_call.1} parent=1 // pred_fallthru
      _
    // Predicated region
    $region26: #{tpu_custom_call.1} parent=1 // pred_check
      _
    $region27: #{tpu_custom_call.1} parent=1 // pred_check_branch
      %29 = sbr.rel (0) target = $region29
    $region28: #{tpu_custom_call.1} parent=1 // pred_region
      _
    $region29: #{tpu_custom_call.1} parent=1 // pred_fallthru
      _
    %v30 = vld [vmem:[%s0] sm:$0xff]
    %v31 = vld [vmem:[%s1] sm:$0xff]
    %v32 = vld [vmem:[%s1 + $0x8] sm:$0xff]
    %v33 = vld [vmem:[%s1 + $0x10] sm:$0xff]
    %v34 = vld [vmem:[%s1 + $0x18] sm:$0xff]
    %v35 = vld [vmem:[%s2] sm:$0x1]
    %v37 = vlaneseq
    %v38 = vshrl.u32 %v37, 7
    %v39 = vsub.s32 0, %v38
    %v40 = vrot.slane %v35, %v39
    %vm42 = vcmask 261120
    %v44 = vsel %vm42, %v30, 0
    %46 = vmatprep.subr.mxu0 0.0
    %v47 = vand.u32 %v31, 4294901760
    %48 = vmatpush1.msra.mxu0 %v47
    %49 = vmatprep.subr.mxu0 0.0
    %v50 = vand.u32 %v32, 4294901760
    %51 = vmatpush1.msra.mxu0 %v50
    %52 = vmatprep.subr.mxu0 0.0
    %v53 = vand.u32 %v33, 4294901760
    %54 = vmatpush1.msra.mxu0 %v53
    %55 = vmatprep.subr.mxu0 0.0
    %v56 = vand.u32 %v34, 4294901760
    %57 = vmatpush1.msra.mxu0 %v56
    %58 = vmatprep.subr.mxu0 0.0
    %59 = vmatpush1.msra.mxu0 0.0
    %60 = vmatprep.subr.mxu0 0.0
    %61 = vmatpush1.msra.mxu0 0.0
    %62 = vmatprep.subr.mxu0 0.0
    %63 = vmatpush1.msra.mxu0 0.0
    %64 = vmatprep.subr.mxu0 0.0
    %65 = vmatpush1.msra.mxu0 0.0
    %66 = vmatprep.subr.mxu0 0.0
    %67 = vmatpush1.msra.mxu0 0.0
    %68 = vmatprep.subr.mxu0 0.0
    %69 = vmatpush1.msra.mxu0 0.0
    %70 = vmatprep.subr.mxu0 0.0
    %71 = vmatpush1.msra.mxu0 0.0
    %72 = vmatprep.subr.mxu0 0.0
    %73 = vmatpush1.msra.mxu0 0.0
    %74 = vmatprep.subr.mxu0 0.0
    %75 = vmatpush1.msra.mxu0 0.0
    %76 = vmatprep.subr.mxu0 0.0
    %77 = vmatpush1.msra.mxu0 0.0
    %78 = vmatprep.subr.mxu0 0.0
    %79 = vmatpush1.msra.mxu0 0.0
    %80 = vmatprep.subr.mxu0 0.0
    %81 = vmatpush1.msra.mxu0 0.0
    %82 = vmatprep.subr.mxu0 0.0
    %83 = vmatpush1.msra.mxu0 0.0
    %84 = vmatprep.subr.mxu0 0.0
    %85 = vmatpush1.msra.mxu0 0.0
    %86 = vmatprep.subr.mxu0 0.0
    %87 = vmatpush1.msra.mxu0 0.0
    %88 = vmatprep.subr.mxu0 0.0
    %89 = vmatpush1.msra.mxu0 0.0
    %90 = vmatprep.subr.mxu0 0.0
    %91 = vmatpush1.msra.mxu0 0.0
    %92 = vmatprep.subr.mxu0 0.0
    %93 = vmatpush1.msra.mxu0 0.0
    %94 = vmatprep.subr.mxu0 0.0
    %95 = vmatpush1.msra.mxu0 0.0
    %96 = vmatprep.subr.mxu0 0.0
    %97 = vmatpush1.msra.mxu0 0.0
    %98 = vmatprep.subr.mxu0 0.0
    %99 = vmatpush1.msra.mxu0 0.0
    %100 = vmatprep.subr.mxu0 0.0
    %101 = vmatpush1.msra.mxu0 0.0
    %102 = vmatprep.subr.mxu0 0.0
    %103 = vmatpush1.msra.mxu0 0.0
    %104 = vmatprep.subr.mxu0 0.0
    %105 = vmatpush1.msra.mxu0 0.0
    %106 = vmatprep.subr.mxu0 0.0
    %107 = vmatpush1.msra.mxu0 0.0
    %108 = vmatprep.subr.mxu0 0.0
    %109 = vmatpush1.msra.mxu0 0.0
    %110 = vmatprep.subr.mxu0 0.0
    %111 = vmatpush1.msra.mxu0 0.0
    %112 = vmatprep.subr.mxu0 0.0
    %113 = vmatpush1.msra.mxu0 0.0
    %114 = vmatprep.mubr.f32.mxu0 0.0
    %v115 = vand.u32 %v44, 4294901760
    %v116 = vsub.f32 %v44, %v115
    %v117 = vand.u32 %v116, 4294901760
    %v118 = vsub.f32 %v116, %v117
    %v119 = vand.u32 %v118, 4294901760
    %120 = vmatmul.mubr.f32.gmra.mrb[0].mxu0 %v119
    %v121 = vpop.f32.mrb[0].mxu0
    %v122 = vadd.f32 %v40, %v121
    %v123 = vpop.f32.mrb[0].mxu0
    %124 = vdwg.mxu0
    %125 = vmatprep.subr.mxu0 0.0
    %v126 = vand.u32 %v31, 4294901760
    %v127 = vsub.f32 %v31, %v126
    %v128 = vand.u32 %v127, 4294901760
    %v129 = vsub.f32 %v127, %v128
    %v130 = vand.u32 %v129, 4294901760
    %131 = vmatpush1.msra.mxu0 %v130
    %132 = vmatprep.subr.mxu0 0.0
    %v133 = vand.u32 %v32, 4294901760
    %v134 = vsub.f32 %v32, %v133
    %v135 = vand.u32 %v134, 4294901760
    %v136 = vsub.f32 %v134, %v135
    %v137 = vand.u32 %v136, 4294901760
    %138 = vmatpush1.msra.mxu0 %v137
    %139 = vmatprep.subr.mxu0 0.0
    %v140 = vand.u32 %v33, 4294901760
    %v141 = vsub.f32 %v33, %v140
    %v142 = vand.u32 %v141, 4294901760
    %v143 = vsub.f32 %v141, %v142
    %v144 = vand.u32 %v143, 4294901760
    %145 = vmatpush1.msra.mxu0 %v144
    %146 = vmatprep.subr.mxu0 0.0
    %v147 = vand.u32 %v34, 4294901760
    %v148 = vsub.f32 %v34, %v147
    %v149 = vand.u32 %v148, 4294901760
    %v150 = vsub.f32 %v148, %v149
    %v151 = vand.u32 %v150, 4294901760
    %152 = vmatpush1.msra.mxu0 %v151
    %153 = vmatprep.subr.mxu0 0.0
    %154 = vmatpush1.msra.mxu0 0.0
    %155 = vmatprep.subr.mxu0 0.0
    %156 = vmatpush1.msra.mxu0 0.0
    %157 = vmatprep.subr.mxu0 0.0
    %158 = vmatpush1.msra.mxu0 0.0
    %159 = vmatprep.subr.mxu0 0.0
    %160 = vmatpush1.msra.mxu0 0.0
    %161 = vmatprep.subr.mxu0 0.0
    %162 = vmatpush1.msra.mxu0 0.0
    %163 = vmatprep.subr.mxu0 0.0
    %164 = vmatpush1.msra.mxu0 0.0
    %165 = vmatprep.subr.mxu0 0.0
    %166 = vmatpush1.msra.mxu0 0.0
    %167 = vmatprep.subr.mxu0 0.0
    %168 = vmatpush1.msra.mxu0 0.0
    %169 = vmatprep.subr.mxu0 0.0
    %170 = vmatpush1.msra.mxu0 0.0
    %171 = vmatprep.subr.mxu0 0.0
    %172 = vmatpush1.msra.mxu0 0.0
    %173 = vmatprep.subr.mxu0 0.0
    %174 = vmatpush1.msra.mxu0 0.0
    %175 = vmatprep.subr.mxu0 0.0
    %176 = vmatpush1.msra.mxu0 0.0
    %177 = vmatprep.subr.mxu0 0.0
    %178 = vmatpush1.msra.mxu0 0.0
    %179 = vmatprep.subr.mxu0 0.0
    %180 = vmatpush1.msra.mxu0 0.0
    %181 = vmatprep.subr.mxu0 0.0
    %182 = vmatpush1.msra.mxu0 0.0
    %183 = vmatprep.subr.mxu0 0.0
    %184 = vmatpush1.msra.mxu0 0.0
    %185 = vmatprep.subr.mxu0 0.0
    %186 = vmatpush1.msra.mxu0 0.0
    %187 = vmatprep.subr.mxu0 0.0
    %188 = vmatpush1.msra.mxu0 0.0
    %189 = vmatprep.subr.mxu0 0.0
    %190 = vmatpush1.msra.mxu0 0.0
    %191 = vmatprep.subr.mxu0 0.0
    %192 = vmatpush1.msra.mxu0 0.0
    %193 = vmatprep.subr.mxu0 0.0
    %194 = vmatpush1.msra.mxu0 0.0
    %195 = vmatprep.subr.mxu0 0.0
    %196 = vmatpush1.msra.mxu0 0.0
    %197 = vmatprep.subr.mxu0 0.0
    %198 = vmatpush1.msra.mxu0 0.0
    %199 = vmatprep.subr.mxu0 0.0
    %200 = vmatpush1.msra.mxu0 0.0
    %201 = vmatprep.subr.mxu0 0.0
    %202 = vmatpush1.msra.mxu0 0.0
    %203 = vmatprep.subr.mxu0 0.0
    %204 = vmatpush1.msra.mxu0 0.0
    %205 = vmatprep.subr.mxu0 0.0
    %206 = vmatpush1.msra.mxu0 0.0
    %207 = vmatprep.subr.mxu0 0.0
    %208 = vmatpush1.msra.mxu0 0.0
    %209 = vmatprep.mubr.f32.mxu0 0.0
    %v210 = vand.u32 %v44, 4294901760
    %211 = vmatmul.mubr.f32.gmra.mrb[0].mxu0 %v210
    %v212 = vpop.f32.mrb[0].mxu0
    %v213 = vadd.f32 %v122, %v212
    %v214 = vpop.f32.mrb[0].mxu0
    %215 = vdwg.mxu0
    %216 = vmatprep.subr.mxu0 0.0
    %v217 = vand.u32 %v31, 4294901760
    %v218 = vsub.f32 %v31, %v217
    %219 = vmatpush1.msra.mxu0 %v218
    %220 = vmatprep.subr.mxu0 0.0
    %v221 = vand.u32 %v32, 4294901760
    %v222 = vsub.f32 %v32, %v221
    %223 = vmatpush1.msra.mxu0 %v222
    %224 = vmatprep.subr.mxu0 0.0
    %v225 = vand.u32 %v33, 4294901760
    %v226 = vsub.f32 %v33, %v225
    %227 = vmatpush1.msra.mxu0 %v226
    %228 = vmatprep.subr.mxu0 0.0
    %v229 = vand.u32 %v34, 4294901760
    %v230 = vsub.f32 %v34, %v229
    %231 = vmatpush1.msra.mxu0 %v230
    %232 = vmatprep.subr.mxu0 0.0
    %233 = vmatpush1.msra.mxu0 0.0
    %234 = vmatprep.subr.mxu0 0.0
    %235 = vmatpush1.msra.mxu0 0.0
    %236 = vmatprep.subr.mxu0 0.0
    %237 = vmatpush1.msra.mxu0 0.0
    %238 = vmatprep.subr.mxu0 0.0
    %239 = vmatpush1.msra.mxu0 0.0
    %240 = vmatprep.subr.mxu0 0.0
    %241 = vmatpush1.msra.mxu0 0.0
    %242 = vmatprep.subr.mxu0 0.0
    %243 = vmatpush1.msra.mxu0 0.0
    %244 = vmatprep.subr.mxu0 0.0
    %245 = vmatpush1.msra.mxu0 0.0
    %246 = vmatprep.subr.mxu0 0.0
    %247 = vmatpush1.msra.mxu0 0.0
    %248 = vmatprep.subr.mxu0 0.0
    %249 = vmatpush1.msra.mxu0 0.0
    %250 = vmatprep.subr.mxu0 0.0
    %251 = vmatpush1.msra.mxu0 0.0
    %252 = vmatprep.subr.mxu0 0.0
    %253 = vmatpush1.msra.mxu0 0.0
    %254 = vmatprep.subr.mxu0 0.0
    %255 = vmatpush1.msra.mxu0 0.0
    %256 = vmatprep.subr.mxu0 0.0
    %257 = vmatpush1.msra.mxu0 0.0
    %258 = vmatprep.subr.mxu0 0.0
    %259 = vmatpush1.msra.mxu0 0.0
    %260 = vmatprep.subr.mxu0 0.0
    %261 = vmatpush1.msra.mxu0 0.0
    %262 = vmatprep.subr.mxu0 0.0
    %263 = vmatpush1.msra.mxu0 0.0
    %264 = vmatprep.subr.mxu0 0.0
    %265 = vmatpush1.msra.mxu0 0.0
    %266 = vmatprep.subr.mxu0 0.0
    %267 = vmatpush1.msra.mxu0 0.0
    %268 = vmatprep.subr.mxu0 0.0
    %269 = vmatpush1.msra.mxu0 0.0
    %270 = vmatprep.subr.mxu0 0.0
    %271 = vmatpush1.msra.mxu0 0.0
    %272 = vmatprep.subr.mxu0 0.0
    %273 = vmatpush1.msra.mxu0 0.0
    %274 = vmatprep.subr.mxu0 0.0
    %275 = vmatpush1.msra.mxu0 0.0
    %276 = vmatprep.subr.mxu0 0.0
    %277 = vmatpush1.msra.mxu0 0.0
    %278 = vmatprep.subr.mxu0 0.0
    %279 = vmatpush1.msra.mxu0 0.0
    %280 = vmatprep.subr.mxu0 0.0
    %281 = vmatpush1.msra.mxu0 0.0
    %282 = vmatprep.subr.mxu0 0.0
    %283 = vmatpush1.msra.mxu0 0.0
    %284 = vmatprep.subr.mxu0 0.0
    %285 = vmatpush1.msra.mxu0 0.0
    %286 = vmatprep.subr.mxu0 0.0
    %287 = vmatpush1.msra.mxu0 0.0
    %288 = vmatprep.mubr.f32.mxu0 0.0
    %v289 = vand.u32 %v44, 4294901760
    %v290 = vsub.f32 %v44, %v289
    %291 = vmatmul.mubr.f32.gmra.mrb[0].mxu0 %v290
    %v292 = vpop.f32.mrb[0].mxu0
    %v293 = vadd.f32 %v213, %v292
    %v294 = vpop.f32.mrb[0].mxu0
    %295 = vdwg.mxu0
    %296 = vmatprep.subr.mxu0 0.0
    %v297 = vand.u32 %v31, 4294901760
    %298 = vmatpush1.msra.mxu0 %v297
    %299 = vmatprep.subr.mxu0 0.0
    %v300 = vand.u32 %v32, 4294901760
    %301 = vmatpush1.msra.mxu0 %v300
    %302 = vmatprep.subr.mxu0 0.0
    %v303 = vand.u32 %v33, 4294901760
    %304 = vmatpush1.msra.mxu0 %v303
    %305 = vmatprep.subr.mxu0 0.0
    %v306 = vand.u32 %v34, 4294901760
    %307 = vmatpush1.msra.mxu0 %v306
    %308 = vmatprep.subr.mxu0 0.0
    %309 = vmatpush1.msra.mxu0 0.0
    %310 = vmatprep.subr.mxu0 0.0
    %311 = vmatpush1.msra.mxu0 0.0
    %312 = vmatprep.subr.mxu0 0.0
    %313 = vmatpush1.msra.mxu0 0.0
    %314 = vmatprep.subr.mxu0 0.0
    %315 = vmatpush1.msra.mxu0 0.0
    %316 = vmatprep.subr.mxu0 0.0
    %317 = vmatpush1.msra.mxu0 0.0
    %318 = vmatprep.subr.mxu0 0.0
    %319 = vmatpush1.msra.mxu0 0.0
    %320 = vmatprep.subr.mxu0 0.0
    %321 = vmatpush1.msra.mxu0 0.0
    %322 = vmatprep.subr.mxu0 0.0
    %323 = vmatpush1.msra.mxu0 0.0
    %324 = vmatprep.subr.mxu0 0.0
    %325 = vmatpush1.msra.mxu0 0.0
    %326 = vmatprep.subr.mxu0 0.0
    %327 = vmatpush1.msra.mxu0 0.0
    %328 = vmatprep.subr.mxu0 0.0
    %329 = vmatpush1.msra.mxu0 0.0
    %330 = vmatprep.subr.mxu0 0.0
    %331 = vmatpush1.msra.mxu0 0.0
    %332 = vmatprep.subr.mxu0 0.0
    %333 = vmatpush1.msra.mxu0 0.0
    %334 = vmatprep.subr.mxu0 0.0
    %335 = vmatpush1.msra.mxu0 0.0
    %336 = vmatprep.subr.mxu0 0.0
    %337 = vmatpush1.msra.mxu0 0.0
    %338 = vmatprep.subr.mxu0 0.0
    %339 = vmatpush1.msra.mxu0 0.0
    %340 = vmatprep.subr.mxu0 0.0
    %341 = vmatpush1.msra.mxu0 0.0
    %342 = vmatprep.subr.mxu0 0.0
    %343 = vmatpush1.msra.mxu0 0.0
    %344 = vmatprep.subr.mxu0 0.0
    %345 = vmatpush1.msra.mxu0 0.0
    %346 = vmatprep.subr.mxu0 0.0
    %347 = vmatpush1.msra.mxu0 0.0
    %348 = vmatprep.subr.mxu0 0.0
    %349 = vmatpush1.msra.mxu0 0.0
    %350 = vmatprep.subr.mxu0 0.0
    %351 = vmatpush1.msra.mxu0 0.0
    %352 = vmatprep.subr.mxu0 0.0
    %353 = vmatpush1.msra.mxu0 0.0
    %354 = vmatprep.subr.mxu0 0.0
    %355 = vmatpush1.msra.mxu0 0.0
    %356 = vmatprep.subr.mxu0 0.0
    %357 = vmatpush1.msra.mxu0 0.0
    %358 = vmatprep.subr.mxu0 0.0
    %359 = vmatpush1.msra.mxu0 0.0
    %360 = vmatprep.subr.mxu0 0.0
    %361 = vmatpush1.msra.mxu0 0.0
    %362 = vmatprep.subr.mxu0 0.0
    %363 = vmatpush1.msra.mxu0 0.0
    %364 = vmatprep.mubr.f32.mxu0 0.0
    %v365 = vand.u32 %v44, 4294901760
    %v366 = vsub.f32 %v44, %v365
    %v367 = vand.u32 %v366, 4294901760
    %368 = vmatmul.mubr.f32.gmra.mrb[0].mxu0 %v367
    %v369 = vpop.f32.mrb[0].mxu0
    %v370 = vadd.f32 %v293, %v369
    %v371 = vpop.f32.mrb[0].mxu0
    %372 = vdwg.mxu0
    %373 = vmatprep.subr.mxu0 0.0
    %v374 = vand.u32 %v31, 4294901760
    %v375 = vsub.f32 %v31, %v374
    %v376 = vand.u32 %v375, 4294901760
    %377 = vmatpush1.msra.mxu0 %v376
    %378 = vmatprep.subr.mxu0 0.0
    %v379 = vand.u32 %v32, 4294901760
    %v380 = vsub.f32 %v32, %v379
    %v381 = vand.u32 %v380, 4294901760
    %382 = vmatpush1.msra.mxu0 %v381
    %383 = vmatprep.subr.mxu0 0.0
    %v384 = vand.u32 %v33, 4294901760
    %v385 = vsub.f32 %v33, %v384
    %v386 = vand.u32 %v385, 4294901760
    %387 = vmatpush1.msra.mxu0 %v386
    %388 = vmatprep.subr.mxu0 0.0
    %v389 = vand.u32 %v34, 4294901760
    %v390 = vsub.f32 %v34, %v389
    %v391 = vand.u32 %v390, 4294901760
    %392 = vmatpush1.msra.mxu0 %v391
    %393 = vmatprep.subr.mxu0 0.0
    %394 = vmatpush1.msra.mxu0 0.0
    %395 = vmatprep.subr.mxu0 0.0
    %396 = vmatpush1.msra.mxu0 0.0
    %397 = vmatprep.subr.mxu0 0.0
    %398 = vmatpush1.msra.mxu0 0.0
    %399 = vmatprep.subr.mxu0 0.0
    %400 = vmatpush1.msra.mxu0 0.0
    %401 = vmatprep.subr.mxu0 0.0
    %402 = vmatpush1.msra.mxu0 0.0
    %403 = vmatprep.subr.mxu0 0.0
    %404 = vmatpush1.msra.mxu0 0.0
    %405 = vmatprep.subr.mxu0 0.0
    %406 = vmatpush1.msra.mxu0 0.0
    %407 = vmatprep.subr.mxu0 0.0
    %408 = vmatpush1.msra.mxu0 0.0
    %409 = vmatprep.subr.mxu0 0.0
    %410 = vmatpush1.msra.mxu0 0.0
    %411 = vmatprep.subr.mxu0 0.0
    %412 = vmatpush1.msra.mxu0 0.0
    %413 = vmatprep.subr.mxu0 0.0
    %414 = vmatpush1.msra.mxu0 0.0
    %415 = vmatprep.subr.mxu0 0.0
    %416 = vmatpush1.msra.mxu0 0.0
    %417 = vmatprep.subr.mxu0 0.0
    %418 = vmatpush1.msra.mxu0 0.0
    %419 = vmatprep.subr.mxu0 0.0
    %420 = vmatpush1.msra.mxu0 0.0
    %421 = vmatprep.subr.mxu0 0.0
    %422 = vmatpush1.msra.mxu0 0.0
    %423 = vmatprep.subr.mxu0 0.0
    %424 = vmatpush1.msra.mxu0 0.0
    %425 = vmatprep.subr.mxu0 0.0
    %426 = vmatpush1.msra.mxu0 0.0
    %427 = vmatprep.subr.mxu0 0.0
    %428 = vmatpush1.msra.mxu0 0.0
    %429 = vmatprep.subr.mxu0 0.0
    %430 = vmatpush1.msra.mxu0 0.0
    %431 = vmatprep.subr.mxu0 0.0
    %432 = vmatpush1.msra.mxu0 0.0
    %433 = vmatprep.subr.mxu0 0.0
    %434 = vmatpush1.msra.mxu0 0.0
    %435 = vmatprep.subr.mxu0 0.0
    %436 = vmatpush1.msra.mxu0 0.0
    %437 = vmatprep.subr.mxu0 0.0
    %438 = vmatpush1.msra.mxu0 0.0
    %439 = vmatprep.subr.mxu0 0.0
    %440 = vmatpush1.msra.mxu0 0.0
    %441 = vmatprep.subr.mxu0 0.0
    %442 = vmatpush1.msra.mxu0 0.0
    %443 = vmatprep.subr.mxu0 0.0
    %444 = vmatpush1.msra.mxu0 0.0
    %445 = vmatprep.subr.mxu0 0.0
    %446 = vmatpush1.msra.mxu0 0.0
    %447 = vmatprep.subr.mxu0 0.0
    %448 = vmatpush1.msra.mxu0 0.0
    %449 = vmatprep.mubr.f32.mxu0 0.0
    %v450 = vand.u32 %v44, 4294901760
    %451 = vmatmul.mubr.f32.gmra.mrb[0].mxu0 %v450
    %v452 = vpop.f32.mrb[0].mxu0
    %v453 = vadd.f32 %v370, %v452
    %v454 = vpop.f32.mrb[0].mxu0
    %455 = vdwg.mxu0
    %456 = vmatprep.subr.mxu0 0.0
    %v457 = vand.u32 %v31, 4294901760
    %458 = vmatpush1.msra.mxu0 %v457
    %459 = vmatprep.subr.mxu0 0.0
    %v460 = vand.u32 %v32, 4294901760
    %461 = vmatpush1.msra.mxu0 %v460
    %462 = vmatprep.subr.mxu0 0.0
    %v463 = vand.u32 %v33, 4294901760
    %464 = vmatpush1.msra.mxu0 %v463
    %465 = vmatprep.subr.mxu0 0.0
    %v466 = vand.u32 %v34, 4294901760
    %467 = vmatpush1.msra.mxu0 %v466
    %468 = vmatprep.subr.mxu0 0.0
    %469 = vmatpush1.msra.mxu0 0.0
    %470 = vmatprep.subr.mxu0 0.0
    %471 = vmatpush1.msra.mxu0 0.0
    %472 = vmatprep.subr.mxu0 0.0
    %473 = vmatpush1.msra.mxu0 0.0
    %474 = vmatprep.subr.mxu0 0.0
    %475 = vmatpush1.msra.mxu0 0.0
    %476 = vmatprep.subr.mxu0 0.0
    %477 = vmatpush1.msra.mxu0 0.0
    %478 = vmatprep.subr.mxu0 0.0
    %479 = vmatpush1.msra.mxu0 0.0
    %480 = vmatprep.subr.mxu0 0.0
    %481 = vmatpush1.msra.mxu0 0.0
    %482 = vmatprep.subr.mxu0 0.0
    %483 = vmatpush1.msra.mxu0 0.0
    %484 = vmatprep.subr.mxu0 0.0
    %485 = vmatpush1.msra.mxu0 0.0
    %486 = vmatprep.subr.mxu0 0.0
    %487 = vmatpush1.msra.mxu0 0.0
    %488 = vmatprep.subr.mxu0 0.0
    %489 = vmatpush1.msra.mxu0 0.0
    %490 = vmatprep.subr.mxu0 0.0
    %491 = vmatpush1.msra.mxu0 0.0
    %492 = vmatprep.subr.mxu0 0.0
    %493 = vmatpush1.msra.mxu0 0.0
    %494 = vmatprep.subr.mxu0 0.0
    %495 = vmatpush1.msra.mxu0 0.0
    %496 = vmatprep.subr.mxu0 0.0
    %497 = vmatpush1.msra.mxu0 0.0
    %498 = vmatprep.subr.mxu0 0.0
    %499 = vmatpush1.msra.mxu0 0.0
    %500 = vmatprep.subr.mxu0 0.0
    %501 = vmatpush1.msra.mxu0 0.0
    %502 = vmatprep.subr.mxu0 0.0
    %503 = vmatpush1.msra.mxu0 0.0
    %504 = vmatprep.subr.mxu0 0.0
    %505 = vmatpush1.msra.mxu0 0.0
    %506 = vmatprep.subr.mxu0 0.0
    %507 = vmatpush1.msra.mxu0 0.0
    %508 = vmatprep.subr.mxu0 0.0
    %509 = vmatpush1.msra.mxu0 0.0
    %510 = vmatprep.subr.mxu0 0.0
    %511 = vmatpush1.msra.mxu0 0.0
    %512 = vmatprep.subr.mxu0 0.0
    %513 = vmatpush1.msra.mxu0 0.0
    %514 = vmatprep.subr.mxu0 0.0
    %515 = vmatpush1.msra.mxu0 0.0
    %516 = vmatprep.subr.mxu0 0.0
    %517 = vmatpush1.msra.mxu0 0.0
    %518 = vmatprep.subr.mxu0 0.0
    %519 = vmatpush1.msra.mxu0 0.0
    %520 = vmatprep.subr.mxu0 0.0
    %521 = vmatpush1.msra.mxu0 0.0
    %522 = vmatprep.subr.mxu0 0.0
    %523 = vmatpush1.msra.mxu0 0.0
    %524 = vmatprep.mubr.f32.mxu0 0.0
    %v525 = vand.u32 %v44, 4294901760
    %526 = vmatmul.mubr.f32.gmra.mrb[0].mxu0 %v525
    %v527 = vpop.f32.mrb[0].mxu0
    %v528 = vadd.f32 %v453, %v527
    %v529 = vpop.f32.mrb[0].mxu0
    %530 = vdwg.mxu0
    %v531 = vmin.f32 %v528, 20.0
    %vm532 = vcmp.gt.f32.partialorder %v528, 20.0
    %v533 = vmul.f32 %v531, 1.442695
    %v534 = vpow.pop %v533
    %v535 = vadd.f32 %v534, 1.0
    %v536 = vlog2.pop %v535
    %v537 = vmul.f32 %v536, 0.6931472
    %v538 = vsel %vm532, %v528, %v537
    %v539 = vld [vmem:[%s3] sm:$0xff]
    %v540 = vld [vmem:[%s3 + $0x8] sm:$0xff]
    %v541 = vld [vmem:[%s3 + $0x10] sm:$0xff]
    %v542 = vld [vmem:[%s3 + $0x18] sm:$0xff]
    %v543 = vld [vmem:[%s4] sm:$0x1]
    %v545 = vlaneseq
    %v546 = vshrl.u32 %v545, 7
    %v547 = vsub.s32 0, %v546
    %v548 = vrot.slane %v543, %v547
    %v551 = vsel %vm42, %v538, 0
    %553 = vmatprep.subr.mxu0 0.0
    %v554 = vand.u32 %v539, 4294901760
    %555 = vmatpush1.msra.mxu0 %v554
    %556 = vmatprep.subr.mxu0 0.0
    %v557 = vand.u32 %v540, 4294901760
    %558 = vmatpush1.msra.mxu0 %v557
    %559 = vmatprep.subr.mxu0 0.0
    %v560 = vand.u32 %v541, 4294901760
    %561 = vmatpush1.msra.mxu0 %v560
    %562 = vmatprep.subr.mxu0 0.0
    %v563 = vand.u32 %v542, 4294901760
    %564 = vmatpush1.msra.mxu0 %v563
    %565 = vmatprep.subr.mxu0 0.0
    %566 = vmatpush1.msra.mxu0 0.0
    %567 = vmatprep.subr.mxu0 0.0
    %568 = vmatpush1.msra.mxu0 0.0
    %569 = vmatprep.subr.mxu0 0.0
    %570 = vmatpush1.msra.mxu0 0.0
    %571 = vmatprep.subr.mxu0 0.0
    %572 = vmatpush1.msra.mxu0 0.0
    %573 = vmatprep.subr.mxu0 0.0
    %574 = vmatpush1.msra.mxu0 0.0
    %575 = vmatprep.subr.mxu0 0.0
    %576 = vmatpush1.msra.mxu0 0.0
    %577 = vmatprep.subr.mxu0 0.0
    %578 = vmatpush1.msra.mxu0 0.0
    %579 = vmatprep.subr.mxu0 0.0
    %580 = vmatpush1.msra.mxu0 0.0
    %581 = vmatprep.subr.mxu0 0.0
    %582 = vmatpush1.msra.mxu0 0.0
    %583 = vmatprep.subr.mxu0 0.0
    %584 = vmatpush1.msra.mxu0 0.0
    %585 = vmatprep.subr.mxu0 0.0
    %586 = vmatpush1.msra.mxu0 0.0
    %587 = vmatprep.subr.mxu0 0.0
    %588 = vmatpush1.msra.mxu0 0.0
    %589 = vmatprep.subr.mxu0 0.0
    %590 = vmatpush1.msra.mxu0 0.0
    %591 = vmatprep.subr.mxu0 0.0
    %592 = vmatpush1.msra.mxu0 0.0
    %593 = vmatprep.subr.mxu0 0.0
    %594 = vmatpush1.msra.mxu0 0.0
    %595 = vmatprep.subr.mxu0 0.0
    %596 = vmatpush1.msra.mxu0 0.0
    %597 = vmatprep.subr.mxu0 0.0
    %598 = vmatpush1.msra.mxu0 0.0
    %599 = vmatprep.subr.mxu0 0.0
    %600 = vmatpush1.msra.mxu0 0.0
    %601 = vmatprep.subr.mxu0 0.0
    %602 = vmatpush1.msra.mxu0 0.0
    %603 = vmatprep.subr.mxu0 0.0
    %604 = vmatpush1.msra.mxu0 0.0
    %605 = vmatprep.subr.mxu0 0.0
    %606 = vmatpush1.msra.mxu0 0.0
    %607 = vmatprep.subr.mxu0 0.0
    %608 = vmatpush1.msra.mxu0 0.0
    %609 = vmatprep.subr.mxu0 0.0
    %610 = vmatpush1.msra.mxu0 0.0
    %611 = vmatprep.subr.mxu0 0.0
    %612 = vmatpush1.msra.mxu0 0.0
    %613 = vmatprep.subr.mxu0 0.0
    %614 = vmatpush1.msra.mxu0 0.0
    %615 = vmatprep.subr.mxu0 0.0
    %616 = vmatpush1.msra.mxu0 0.0
    %617 = vmatprep.subr.mxu0 0.0
    %618 = vmatpush1.msra.mxu0 0.0
    %619 = vmatprep.subr.mxu0 0.0
    %620 = vmatpush1.msra.mxu0 0.0
    %621 = vmatprep.mubr.f32.mxu0 0.0
    %v622 = vand.u32 %v551, 4294901760
    %v623 = vsub.f32 %v551, %v622
    %v624 = vand.u32 %v623, 4294901760
    %v625 = vsub.f32 %v623, %v624
    %v626 = vand.u32 %v625, 4294901760
    %627 = vmatmul.mubr.f32.gmra.mrb[0].mxu0 %v626
    %v628 = vpop.f32.mrb[0].mxu0
    %v629 = vadd.f32 %v548, %v628
    %v630 = vpop.f32.mrb[0].mxu0
    %631 = vdwg.mxu0
    %632 = vmatprep.subr.mxu0 0.0
    %v633 = vand.u32 %v539, 4294901760
    %v634 = vsub.f32 %v539, %v633
    %v635 = vand.u32 %v634, 4294901760
    %v636 = vsub.f32 %v634, %v635
    %v637 = vand.u32 %v636, 4294901760
    %638 = vmatpush1.msra.mxu0 %v637
    %639 = vmatprep.subr.mxu0 0.0
    %v640 = vand.u32 %v540, 4294901760
    %v641 = vsub.f32 %v540, %v640
    %v642 = vand.u32 %v641, 4294901760
    %v643 = vsub.f32 %v641, %v642
    %v644 = vand.u32 %v643, 4294901760
    %645 = vmatpush1.msra.mxu0 %v644
    %646 = vmatprep.subr.mxu0 0.0
    %v647 = vand.u32 %v541, 4294901760
    %v648 = vsub.f32 %v541, %v647
    %v649 = vand.u32 %v648, 4294901760
    %v650 = vsub.f32 %v648, %v649
    %v651 = vand.u32 %v650, 4294901760
    %652 = vmatpush1.msra.mxu0 %v651
    %653 = vmatprep.subr.mxu0 0.0
    %v654 = vand.u32 %v542, 4294901760
    %v655 = vsub.f32 %v542, %v654
    %v656 = vand.u32 %v655, 4294901760
    %v657 = vsub.f32 %v655, %v656
    %v658 = vand.u32 %v657, 4294901760
    %659 = vmatpush1.msra.mxu0 %v658
    %660 = vmatprep.subr.mxu0 0.0
    %661 = vmatpush1.msra.mxu0 0.0
    %662 = vmatprep.subr.mxu0 0.0
    %663 = vmatpush1.msra.mxu0 0.0
    %664 = vmatprep.subr.mxu0 0.0
    %665 = vmatpush1.msra.mxu0 0.0
    %666 = vmatprep.subr.mxu0 0.0
    %667 = vmatpush1.msra.mxu0 0.0
    %668 = vmatprep.subr.mxu0 0.0
    %669 = vmatpush1.msra.mxu0 0.0
    %670 = vmatprep.subr.mxu0 0.0
    %671 = vmatpush1.msra.mxu0 0.0
    %672 = vmatprep.subr.mxu0 0.0
    %673 = vmatpush1.msra.mxu0 0.0
    %674 = vmatprep.subr.mxu0 0.0
    %675 = vmatpush1.msra.mxu0 0.0
    %676 = vmatprep.subr.mxu0 0.0
    %677 = vmatpush1.msra.mxu0 0.0
    %678 = vmatprep.subr.mxu0 0.0
    %679 = vmatpush1.msra.mxu0 0.0
    %680 = vmatprep.subr.mxu0 0.0
    %681 = vmatpush1.msra.mxu0 0.0
    %682 = vmatprep.subr.mxu0 0.0
    %683 = vmatpush1.msra.mxu0 0.0
    %684 = vmatprep.subr.mxu0 0.0
    %685 = vmatpush1.msra.mxu0 0.0
    %686 = vmatprep.subr.mxu0 0.0
    %687 = vmatpush1.msra.mxu0 0.0
    %688 = vmatprep.subr.mxu0 0.0
    %689 = vmatpush1.msra.mxu0 0.0
    %690 = vmatprep.subr.mxu0 0.0
    %691 = vmatpush1.msra.mxu0 0.0
    %692 = vmatprep.subr.mxu0 0.0
    %693 = vmatpush1.msra.mxu0 0.0
    %694 = vmatprep.subr.mxu0 0.0
    %695 = vmatpush1.msra.mxu0 0.0
    %696 = vmatprep.subr.mxu0 0.0
    %697 = vmatpush1.msra.mxu0 0.0
    %698 = vmatprep.subr.mxu0 0.0
    %699 = vmatpush1.msra.mxu0 0.0
    %700 = vmatprep.subr.mxu0 0.0
    %701 = vmatpush1.msra.mxu0 0.0
    %702 = vmatprep.subr.mxu0 0.0
    %703 = vmatpush1.msra.mxu0 0.0
    %704 = vmatprep.subr.mxu0 0.0
    %705 = vmatpush1.msra.mxu0 0.0
    %706 = vmatprep.subr.mxu0 0.0
    %707 = vmatpush1.msra.mxu0 0.0
    %708 = vmatprep.subr.mxu0 0.0
    %709 = vmatpush1.msra.mxu0 0.0
    %710 = vmatprep.subr.mxu0 0.0
    %711 = vmatpush1.msra.mxu0 0.0
    %712 = vmatprep.subr.mxu0 0.0
    %713 = vmatpush1.msra.mxu0 0.0
    %714 = vmatprep.subr.mxu0 0.0
    %715 = vmatpush1.msra.mxu0 0.0
    %716 = vmatprep.mubr.f32.mxu0 0.0
    %v717 = vand.u32 %v551, 4294901760
    %718 = vmatmul.mubr.f32.gmra.mrb[0].mxu0 %v717
    %v719 = vpop.f32.mrb[0].mxu0
    %v720 = vadd.f32 %v629, %v719
    %v721 = vpop.f32.mrb[0].mxu0
    %722 = vdwg.mxu0
    %723 = vmatprep.subr.mxu0 0.0
    %v724 = vand.u32 %v539, 4294901760
    %v725 = vsub.f32 %v539, %v724
    %726 = vmatpush1.msra.mxu0 %v725
    %727 = vmatprep.subr.mxu0 0.0
    %v728 = vand.u32 %v540, 4294901760
    %v729 = vsub.f32 %v540, %v728
    %730 = vmatpush1.msra.mxu0 %v729
    %731 = vmatprep.subr.mxu0 0.0
    %v732 = vand.u32 %v541, 4294901760
    %v733 = vsub.f32 %v541, %v732
    %734 = vmatpush1.msra.mxu0 %v733
    %735 = vmatprep.subr.mxu0 0.0
    %v736 = vand.u32 %v542, 4294901760
    %v737 = vsub.f32 %v542, %v736
    %738 = vmatpush1.msra.mxu0 %v737
    %739 = vmatprep.subr.mxu0 0.0
    %740 = vmatpush1.msra.mxu0 0.0
    %741 = vmatprep.subr.mxu0 0.0
    %742 = vmatpush1.msra.mxu0 0.0
    %743 = vmatprep.subr.mxu0 0.0
    %744 = vmatpush1.msra.mxu0 0.0
    %745 = vmatprep.subr.mxu0 0.0
    %746 = vmatpush1.msra.mxu0 0.0
    %747 = vmatprep.subr.mxu0 0.0
    %748 = vmatpush1.msra.mxu0 0.0
    %749 = vmatprep.subr.mxu0 0.0
    %750 = vmatpush1.msra.mxu0 0.0
    %751 = vmatprep.subr.mxu0 0.0
    %752 = vmatpush1.msra.mxu0 0.0
    %753 = vmatprep.subr.mxu0 0.0
    %754 = vmatpush1.msra.mxu0 0.0
    %755 = vmatprep.subr.mxu0 0.0
    %756 = vmatpush1.msra.mxu0 0.0
    %757 = vmatprep.subr.mxu0 0.0
    %758 = vmatpush1.msra.mxu0 0.0
    %759 = vmatprep.subr.mxu0 0.0
    %760 = vmatpush1.msra.mxu0 0.0
    %761 = vmatprep.subr.mxu0 0.0
    %762 = vmatpush1.msra.mxu0 0.0
    %763 = vmatprep.subr.mxu0 0.0
    %764 = vmatpush1.msra.mxu0 0.0
    %765 = vmatprep.subr.mxu0 0.0
    %766 = vmatpush1.msra.mxu0 0.0
    %767 = vmatprep.subr.mxu0 0.0
    %768 = vmatpush1.msra.mxu0 0.0
    %769 = vmatprep.subr.mxu0 0.0
    %770 = vmatpush1.msra.mxu0 0.0
    %771 = vmatprep.subr.mxu0 0.0
    %772 = vmatpush1.msra.mxu0 0.0
    %773 = vmatprep.subr.mxu0 0.0
    %774 = vmatpush1.msra.mxu0 0.0
    %775 = vmatprep.subr.mxu0 0.0
    %776 = vmatpush1.msra.mxu0 0.0
    %777 = vmatprep.subr.mxu0 0.0
    %778 = vmatpush1.msra.mxu0 0.0
    %779 = vmatprep.subr.mxu0 0.0
    %780 = vmatpush1.msra.mxu0 0.0
    %781 = vmatprep.subr.mxu0 0.0
    %782 = vmatpush1.msra.mxu0 0.0
    %783 = vmatprep.subr.mxu0 0.0
    %784 = vmatpush1.msra.mxu0 0.0
    %785 = vmatprep.subr.mxu0 0.0
    %786 = vmatpush1.msra.mxu0 0.0
    %787 = vmatprep.subr.mxu0 0.0
    %788 = vmatpush1.msra.mxu0 0.0
    %789 = vmatprep.subr.mxu0 0.0
    %790 = vmatpush1.msra.mxu0 0.0
    %791 = vmatprep.subr.mxu0 0.0
    %792 = vmatpush1.msra.mxu0 0.0
    %793 = vmatprep.subr.mxu0 0.0
    %794 = vmatpush1.msra.mxu0 0.0
    %795 = vmatprep.mubr.f32.mxu0 0.0
    %v796 = vand.u32 %v551, 4294901760
    %v797 = vsub.f32 %v551, %v796
    %798 = vmatmul.mubr.f32.gmra.mrb[0].mxu0 %v797
    %v799 = vpop.f32.mrb[0].mxu0
    %v800 = vadd.f32 %v720, %v799
    %v801 = vpop.f32.mrb[0].mxu0
    %802 = vdwg.mxu0
    %803 = vmatprep.subr.mxu0 0.0
    %v804 = vand.u32 %v539, 4294901760
    %805 = vmatpush1.msra.mxu0 %v804
    %806 = vmatprep.subr.mxu0 0.0
    %v807 = vand.u32 %v540, 4294901760
    %808 = vmatpush1.msra.mxu0 %v807
    %809 = vmatprep.subr.mxu0 0.0
    %v810 = vand.u32 %v541, 4294901760
    %811 = vmatpush1.msra.mxu0 %v810
    %812 = vmatprep.subr.mxu0 0.0
    %v813 = vand.u32 %v542, 4294901760
    %814 = vmatpush1.msra.mxu0 %v813
    %815 = vmatprep.subr.mxu0 0.0
    %816 = vmatpush1.msra.mxu0 0.0
    %817 = vmatprep.subr.mxu0 0.0
    %818 = vmatpush1.msra.mxu0 0.0
    %819 = vmatprep.subr.mxu0 0.0
    %820 = vmatpush1.msra.mxu0 0.0
    %821 = vmatprep.subr.mxu0 0.0
    %822 = vmatpush1.msra.mxu0 0.0
    %823 = vmatprep.subr.mxu0 0.0
    %824 = vmatpush1.msra.mxu0 0.0
    %825 = vmatprep.subr.mxu0 0.0
    %826 = vmatpush1.msra.mxu0 0.0
    %827 = vmatprep.subr.mxu0 0.0
    %828 = vmatpush1.msra.mxu0 0.0
    %829 = vmatprep.subr.mxu0 0.0
    %830 = vmatpush1.msra.mxu0 0.0
    %831 = vmatprep.subr.mxu0 0.0
    %832 = vmatpush1.msra.mxu0 0.0
    %833 = vmatprep.subr.mxu0 0.0
    %834 = vmatpush1.msra.mxu0 0.0
    %835 = vmatprep.subr.mxu0 0.0
    %836 = vmatpush1.msra.mxu0 0.0
    %837 = vmatprep.subr.mxu0 0.0
    %838 = vmatpush1.msra.mxu0 0.0
    %839 = vmatprep.subr.mxu0 0.0
    %840 = vmatpush1.msra.mxu0 0.0
    %841 = vmatprep.subr.mxu0 0.0
    %842 = vmatpush1.msra.mxu0 0.0
    %843 = vmatprep.subr.mxu0 0.0
    %844 = vmatpush1.msra.mxu0 0.0
    %845 = vmatprep.subr.mxu0 0.0
    %846 = vmatpush1.msra.mxu0 0.0
    %847 = vmatprep.subr.mxu0 0.0
    %848 = vmatpush1.msra.mxu0 0.0
    %849 = vmatprep.subr.mxu0 0.0
    %850 = vmatpush1.msra.mxu0 0.0
    %851 = vmatprep.subr.mxu0 0.0
    %852 = vmatpush1.msra.mxu0 0.0
    %853 = vmatprep.subr.mxu0 0.0
    %854 = vmatpush1.msra.mxu0 0.0
    %855 = vmatprep.subr.mxu0 0.0
    %856 = vmatpush1.msra.mxu0 0.0
    %857 = vmatprep.subr.mxu0 0.0
    %858 = vmatpush1.msra.mxu0 0.0
    %859 = vmatprep.subr.mxu0 0.0
    %860 = vmatpush1.msra.mxu0 0.0
    %861 = vmatprep.subr.mxu0 0.0
    %862 = vmatpush1.msra.mxu0 0.0
    %863 = vmatprep.subr.mxu0 0.0
    %864 = vmatpush1.msra.mxu0 0.0
    %865 = vmatprep.subr.mxu0 0.0
    %866 = vmatpush1.msra.mxu0 0.0
    %867 = vmatprep.subr.mxu0 0.0
    %868 = vmatpush1.msra.mxu0 0.0
    %869 = vmatprep.subr.mxu0 0.0
    %870 = vmatpush1.msra.mxu0 0.0
    %871 = vmatprep.mubr.f32.mxu0 0.0
    %v872 = vand.u32 %v551, 4294901760
    %v873 = vsub.f32 %v551, %v872
    %v874 = vand.u32 %v873, 4294901760
    %875 = vmatmul.mubr.f32.gmra.mrb[0].mxu0 %v874
    %v876 = vpop.f32.mrb[0].mxu0
    %v877 = vadd.f32 %v800, %v876
    %v878 = vpop.f32.mrb[0].mxu0
    %879 = vdwg.mxu0
    %880 = vmatprep.subr.mxu0 0.0
    %v881 = vand.u32 %v539, 4294901760
    %v882 = vsub.f32 %v539, %v881
    %v883 = vand.u32 %v882, 4294901760
    %884 = vmatpush1.msra.mxu0 %v883
    %885 = vmatprep.subr.mxu0 0.0
    %v886 = vand.u32 %v540, 4294901760
    %v887 = vsub.f32 %v540, %v886
    %v888 = vand.u32 %v887, 4294901760
    %889 = vmatpush1.msra.mxu0 %v888
    %890 = vmatprep.subr.mxu0 0.0
    %v891 = vand.u32 %v541, 4294901760
    %v892 = vsub.f32 %v541, %v891
    %v893 = vand.u32 %v892, 4294901760
    %894 = vmatpush1.msra.mxu0 %v893
    %895 = vmatprep.subr.mxu0 0.0
    %v896 = vand.u32 %v542, 4294901760
    %v897 = vsub.f32 %v542, %v896
    %v898 = vand.u32 %v897, 4294901760
    %899 = vmatpush1.msra.mxu0 %v898
    %900 = vmatprep.subr.mxu0 0.0
    %901 = vmatpush1.msra.mxu0 0.0
    %902 = vmatprep.subr.mxu0 0.0
    %903 = vmatpush1.msra.mxu0 0.0
    %904 = vmatprep.subr.mxu0 0.0
    %905 = vmatpush1.msra.mxu0 0.0
    %906 = vmatprep.subr.mxu0 0.0
    %907 = vmatpush1.msra.mxu0 0.0
    %908 = vmatprep.subr.mxu0 0.0
    %909 = vmatpush1.msra.mxu0 0.0
    %910 = vmatprep.subr.mxu0 0.0
    %911 = vmatpush1.msra.mxu0 0.0
    %912 = vmatprep.subr.mxu0 0.0
    %913 = vmatpush1.msra.mxu0 0.0
    %914 = vmatprep.subr.mxu0 0.0
    %915 = vmatpush1.msra.mxu0 0.0
    %916 = vmatprep.subr.mxu0 0.0
    %917 = vmatpush1.msra.mxu0 0.0
    %918 = vmatprep.subr.mxu0 0.0
    %919 = vmatpush1.msra.mxu0 0.0
    %920 = vmatprep.subr.mxu0 0.0
    %921 = vmatpush1.msra.mxu0 0.0
    %922 = vmatprep.subr.mxu0 0.0
    %923 = vmatpush1.msra.mxu0 0.0
    %924 = vmatprep.subr.mxu0 0.0
    %925 = vmatpush1.msra.mxu0 0.0
    %926 = vmatprep.subr.mxu0 0.0
    %927 = vmatpush1.msra.mxu0 0.0
    %928 = vmatprep.subr.mxu0 0.0
    %929 = vmatpush1.msra.mxu0 0.0
    %930 = vmatprep.subr.mxu0 0.0
    %931 = vmatpush1.msra.mxu0 0.0
    %932 = vmatprep.subr.mxu0 0.0
    %933 = vmatpush1.msra.mxu0 0.0
    %934 = vmatprep.subr.mxu0 0.0
    %935 = vmatpush1.msra.mxu0 0.0
    %936 = vmatprep.subr.mxu0 0.0
    %937 = vmatpush1.msra.mxu0 0.0
    %938 = vmatprep.subr.mxu0 0.0
    %939 = vmatpush1.msra.mxu0 0.0
    %940 = vmatprep.subr.mxu0 0.0
    %941 = vmatpush1.msra.mxu0 0.0
    %942 = vmatprep.subr.mxu0 0.0
    %943 = vmatpush1.msra.mxu0 0.0
    %944 = vmatprep.subr.mxu0 0.0
    %945 = vmatpush1.msra.mxu0 0.0
    %946 = vmatprep.subr.mxu0 0.0
    %947 = vmatpush1.msra.mxu0 0.0
    %948 = vmatprep.subr.mxu0 0.0
    %949 = vmatpush1.msra.mxu0 0.0
    %950 = vmatprep.subr.mxu0 0.0
    %951 = vmatpush1.msra.mxu0 0.0
    %952 = vmatprep.subr.mxu0 0.0
    %953 = vmatpush1.msra.mxu0 0.0
    %954 = vmatprep.subr.mxu0 0.0
    %955 = vmatpush1.msra.mxu0 0.0
    %956 = vmatprep.mubr.f32.mxu0 0.0
    %v957 = vand.u32 %v551, 4294901760
    %958 = vmatmul.mubr.f32.gmra.mrb[0].mxu0 %v957
    %v959 = vpop.f32.mrb[0].mxu0
    %v960 = vadd.f32 %v877, %v959
    %v961 = vpop.f32.mrb[0].mxu0
    %962 = vdwg.mxu0
    %963 = vmatprep.subr.mxu0 0.0
    %v964 = vand.u32 %v539, 4294901760
    %965 = vmatpush1.msra.mxu0 %v964
    %966 = vmatprep.subr.mxu0 0.0
    %v967 = vand.u32 %v540, 4294901760
    %968 = vmatpush1.msra.mxu0 %v967
    %969 = vmatprep.subr.mxu0 0.0
    %v970 = vand.u32 %v541, 4294901760
    %971 = vmatpush1.msra.mxu0 %v970
    %972 = vmatprep.subr.mxu0 0.0
    %v973 = vand.u32 %v542, 4294901760
    %974 = vmatpush1.msra.mxu0 %v973
    %975 = vmatprep.subr.mxu0 0.0
    %976 = vmatpush1.msra.mxu0 0.0
    %977 = vmatprep.subr.mxu0 0.0
    %978 = vmatpush1.msra.mxu0 0.0
    %979 = vmatprep.subr.mxu0 0.0
    %980 = vmatpush1.msra.mxu0 0.0
    %981 = vmatprep.subr.mxu0 0.0
    %982 = vmatpush1.msra.mxu0 0.0
    %983 = vmatprep.subr.mxu0 0.0
    %984 = vmatpush1.msra.mxu0 0.0
    %985 = vmatprep.subr.mxu0 0.0
    %986 = vmatpush1.msra.mxu0 0.0
    %987 = vmatprep.subr.mxu0 0.0
    %988 = vmatpush1.msra.mxu0 0.0
    %989 = vmatprep.subr.mxu0 0.0
    %990 = vmatpush1.msra.mxu0 0.0
    %991 = vmatprep.subr.mxu0 0.0
    %992 = vmatpush1.msra.mxu0 0.0
    %993 = vmatprep.subr.mxu0 0.0
    %994 = vmatpush1.msra.mxu0 0.0
    %995 = vmatprep.subr.mxu0 0.0
    %996 = vmatpush1.msra.mxu0 0.0
    %997 = vmatprep.subr.mxu0 0.0
    %998 = vmatpush1.msra.mxu0 0.0
    %999 = vmatprep.subr.mxu0 0.0
    %1000 = vmatpush1.msra.mxu0 0.0
    %1001 = vmatprep.subr.mxu0 0.0
    %1002 = vmatpush1.msra.mxu0 0.0
    %1003 = vmatprep.subr.mxu0 0.0
    %1004 = vmatpush1.msra.mxu0 0.0
    %1005 = vmatprep.subr.mxu0 0.0
    %1006 = vmatpush1.msra.mxu0 0.0
    %1007 = vmatprep.subr.mxu0 0.0
    %1008 = vmatpush1.msra.mxu0 0.0
    %1009 = vmatprep.subr.mxu0 0.0
    %1010 = vmatpush1.msra.mxu0 0.0
    %1011 = vmatprep.subr.mxu0 0.0
    %1012 = vmatpush1.msra.mxu0 0.0
    %1013 = vmatprep.subr.mxu0 0.0
    %1014 = vmatpush1.msra.mxu0 0.0
    %1015 = vmatprep.subr.mxu0 0.0
    %1016 = vmatpush1.msra.mxu0 0.0
    %1017 = vmatprep.subr.mxu0 0.0
    %1018 = vmatpush1.msra.mxu0 0.0
    %1019 = vmatprep.subr.mxu0 0.0
    %1020 = vmatpush1.msra.mxu0 0.0
    %1021 = vmatprep.subr.mxu0 0.0
    %1022 = vmatpush1.msra.mxu0 0.0
    %1023 = vmatprep.subr.mxu0 0.0
    %1024 = vmatpush1.msra.mxu0 0.0
    %1025 = vmatprep.subr.mxu0 0.0
    %1026 = vmatpush1.msra.mxu0 0.0
    %1027 = vmatprep.subr.mxu0 0.0
    %1028 = vmatpush1.msra.mxu0 0.0
    %1029 = vmatprep.subr.mxu0 0.0
    %1030 = vmatpush1.msra.mxu0 0.0
    %1031 = vmatprep.mubr.f32.mxu0 0.0
    %v1032 = vand.u32 %v551, 4294901760
    %1033 = vmatmul.mubr.f32.gmra.mrb[0].mxu0 %v1032
    %v1034 = vpop.f32.mrb[0].mxu0
    %v1035 = vadd.f32 %v960, %v1034
    %v1036 = vpop.f32.mrb[0].mxu0
    %1037 = vdwg.mxu0
    %v1038 = vld [vmem:[%s5] sm:$0xff]
    %v1039 = vld [vmem:[%s5 + $0x8] sm:$0xff]
    %v1040 = vld [vmem:[%s5 + $0x10] sm:$0xff]
    %v1041 = vld [vmem:[%s5 + $0x18] sm:$0xff]
    %v1042 = vld [vmem:[%s6] sm:$0x1]
    %v1044 = vlaneseq
    %v1045 = vshrl.u32 %v1044, 7
    %v1046 = vsub.s32 0, %v1045
    %v1047 = vrot.slane %v1042, %v1046
    %1049 = vmatprep.subr.mxu0 0.0
    %v1050 = vand.u32 %v1038, 4294901760
    %1051 = vmatpush1.msra.mxu0 %v1050
    %1052 = vmatprep.subr.mxu0 0.0
    %v1053 = vand.u32 %v1039, 4294901760
    %1054 = vmatpush1.msra.mxu0 %v1053
    %1055 = vmatprep.subr.mxu0 0.0
    %v1056 = vand.u32 %v1040, 4294901760
    %1057 = vmatpush1.msra.mxu0 %v1056
    %1058 = vmatprep.subr.mxu0 0.0
    %v1059 = vand.u32 %v1041, 4294901760
    %1060 = vmatpush1.msra.mxu0 %v1059
    %1061 = vmatprep.subr.mxu0 0.0
    %1062 = vmatpush1.msra.mxu0 0.0
    %1063 = vmatprep.subr.mxu0 0.0
    %1064 = vmatpush1.msra.mxu0 0.0
    %1065 = vmatprep.subr.mxu0 0.0
    %1066 = vmatpush1.msra.mxu0 0.0
    %1067 = vmatprep.subr.mxu0 0.0
    %1068 = vmatpush1.msra.mxu0 0.0
    %1069 = vmatprep.subr.mxu0 0.0
    %1070 = vmatpush1.msra.mxu0 0.0
    %1071 = vmatprep.subr.mxu0 0.0
    %1072 = vmatpush1.msra.mxu0 0.0
    %1073 = vmatprep.subr.mxu0 0.0
    %1074 = vmatpush1.msra.mxu0 0.0
    %1075 = vmatprep.subr.mxu0 0.0
    %1076 = vmatpush1.msra.mxu0 0.0
    %1077 = vmatprep.subr.mxu0 0.0
    %1078 = vmatpush1.msra.mxu0 0.0
    %1079 = vmatprep.subr.mxu0 0.0
    %1080 = vmatpush1.msra.mxu0 0.0
    %1081 = vmatprep.subr.mxu0 0.0
    %1082 = vmatpush1.msra.mxu0 0.0
    %1083 = vmatprep.subr.mxu0 0.0
    %1084 = vmatpush1.msra.mxu0 0.0
    %1085 = vmatprep.subr.mxu0 0.0
    %1086 = vmatpush1.msra.mxu0 0.0
    %1087 = vmatprep.subr.mxu0 0.0
    %1088 = vmatpush1.msra.mxu0 0.0
    %1089 = vmatprep.subr.mxu0 0.0
    %1090 = vmatpush1.msra.mxu0 0.0
    %1091 = vmatprep.subr.mxu0 0.0
    %1092 = vmatpush1.msra.mxu0 0.0
    %1093 = vmatprep.subr.mxu0 0.0
    %1094 = vmatpush1.msra.mxu0 0.0
    %1095 = vmatprep.subr.mxu0 0.0
    %1096 = vmatpush1.msra.mxu0 0.0
    %1097 = vmatprep.subr.mxu0 0.0
    %1098 = vmatpush1.msra.mxu0 0.0
    %1099 = vmatprep.subr.mxu0 0.0
    %1100 = vmatpush1.msra.mxu0 0.0
    %1101 = vmatprep.subr.mxu0 0.0
    %1102 = vmatpush1.msra.mxu0 0.0
    %1103 = vmatprep.subr.mxu0 0.0
    %1104 = vmatpush1.msra.mxu0 0.0
    %1105 = vmatprep.subr.mxu0 0.0
    %1106 = vmatpush1.msra.mxu0 0.0
    %1107 = vmatprep.subr.mxu0 0.0
    %1108 = vmatpush1.msra.mxu0 0.0
    %1109 = vmatprep.subr.mxu0 0.0
    %1110 = vmatpush1.msra.mxu0 0.0
    %1111 = vmatprep.subr.mxu0 0.0
    %1112 = vmatpush1.msra.mxu0 0.0
    %1113 = vmatprep.subr.mxu0 0.0
    %1114 = vmatpush1.msra.mxu0 0.0
    %1115 = vmatprep.subr.mxu0 0.0
    %1116 = vmatpush1.msra.mxu0 0.0
    %1117 = vmatprep.mubr.f32.mxu0 0.0
    %v1118 = vand.u32 %v551, 4294901760
    %v1119 = vsub.f32 %v551, %v1118
    %v1120 = vand.u32 %v1119, 4294901760
    %v1121 = vsub.f32 %v1119, %v1120
    %v1122 = vand.u32 %v1121, 4294901760
    %1123 = vmatmul.mubr.f32.gmra.mrb[0].mxu0 %v1122
    %v1124 = vpop.f32.mrb[0].mxu0
    %v1125 = vadd.f32 %v1047, %v1124
    %v1126 = vpop.f32.mrb[0].mxu0
    %1127 = vdwg.mxu0
    %1128 = vmatprep.subr.mxu0 0.0
    %v1129 = vand.u32 %v1038, 4294901760
    %v1130 = vsub.f32 %v1038, %v1129
    %v1131 = vand.u32 %v1130, 4294901760
    %v1132 = vsub.f32 %v1130, %v1131
    %v1133 = vand.u32 %v1132, 4294901760
    %1134 = vmatpush1.msra.mxu0 %v1133
    %1135 = vmatprep.subr.mxu0 0.0
    %v1136 = vand.u32 %v1039, 4294901760
    %v1137 = vsub.f32 %v1039, %v1136
    %v1138 = vand.u32 %v1137, 4294901760
    %v1139 = vsub.f32 %v1137, %v1138
    %v1140 = vand.u32 %v1139, 4294901760
    %1141 = vmatpush1.msra.mxu0 %v1140
    %1142 = vmatprep.subr.mxu0 0.0
    %v1143 = vand.u32 %v1040, 4294901760
    %v1144 = vsub.f32 %v1040, %v1143
    %v1145 = vand.u32 %v1144, 4294901760
    %v1146 = vsub.f32 %v1144, %v1145
    %v1147 = vand.u32 %v1146, 4294901760
    %1148 = vmatpush1.msra.mxu0 %v1147
    %1149 = vmatprep.subr.mxu0 0.0
    %v1150 = vand.u32 %v1041, 4294901760
    %v1151 = vsub.f32 %v1041, %v1150
    %v1152 = vand.u32 %v1151, 4294901760
    %v1153 = vsub.f32 %v1151, %v1152
    %v1154 = vand.u32 %v1153, 4294901760
    %1155 = vmatpush1.msra.mxu0 %v1154
    %1156 = vmatprep.subr.mxu0 0.0
    %1157 = vmatpush1.msra.mxu0 0.0
    %1158 = vmatprep.subr.mxu0 0.0
    %1159 = vmatpush1.msra.mxu0 0.0
    %1160 = vmatprep.subr.mxu0 0.0
    %1161 = vmatpush1.msra.mxu0 0.0
    %1162 = vmatprep.subr.mxu0 0.0
    %1163 = vmatpush1.msra.mxu0 0.0
    %1164 = vmatprep.subr.mxu0 0.0
    %1165 = vmatpush1.msra.mxu0 0.0
    %1166 = vmatprep.subr.mxu0 0.0
    %1167 = vmatpush1.msra.mxu0 0.0
    %1168 = vmatprep.subr.mxu0 0.0
    %1169 = vmatpush1.msra.mxu0 0.0
    %1170 = vmatprep.subr.mxu0 0.0
    %1171 = vmatpush1.msra.mxu0 0.0
    %1172 = vmatprep.subr.mxu0 0.0
    %1173 = vmatpush1.msra.mxu0 0.0
    %1174 = vmatprep.subr.mxu0 0.0
    %1175 = vmatpush1.msra.mxu0 0.0
    %1176 = vmatprep.subr.mxu0 0.0
    %1177 = vmatpush1.msra.mxu0 0.0
    %1178 = vmatprep.subr.mxu0 0.0
    %1179 = vmatpush1.msra.mxu0 0.0
    %1180 = vmatprep.subr.mxu0 0.0
    %1181 = vmatpush1.msra.mxu0 0.0
    %1182 = vmatprep.subr.mxu0 0.0
    %1183 = vmatpush1.msra.mxu0 0.0
    %1184 = vmatprep.subr.mxu0 0.0
    %1185 = vmatpush1.msra.mxu0 0.0
    %1186 = vmatprep.subr.mxu0 0.0
    %1187 = vmatpush1.msra.mxu0 0.0
    %1188 = vmatprep.subr.mxu0 0.0
    %1189 = vmatpush1.msra.mxu0 0.0
    %1190 = vmatprep.subr.mxu0 0.0
    %1191 = vmatpush1.msra.mxu0 0.0
    %1192 = vmatprep.subr.mxu0 0.0
    %1193 = vmatpush1.msra.mxu0 0.0
    %1194 = vmatprep.subr.mxu0 0.0
    %1195 = vmatpush1.msra.mxu0 0.0
    %1196 = vmatprep.subr.mxu0 0.0
    %1197 = vmatpush1.msra.mxu0 0.0
    %1198 = vmatprep.subr.mxu0 0.0
    %1199 = vmatpush1.msra.mxu0 0.0
    %1200 = vmatprep.subr.mxu0 0.0
    %1201 = vmatpush1.msra.mxu0 0.0
    %1202 = vmatprep.subr.mxu0 0.0
    %1203 = vmatpush1.msra.mxu0 0.0
    %1204 = vmatprep.subr.mxu0 0.0
    %1205 = vmatpush1.msra.mxu0 0.0
    %1206 = vmatprep.subr.mxu0 0.0
    %1207 = vmatpush1.msra.mxu0 0.0
    %1208 = vmatprep.subr.mxu0 0.0
    %1209 = vmatpush1.msra.mxu0 0.0
    %1210 = vmatprep.subr.mxu0 0.0
    %1211 = vmatpush1.msra.mxu0 0.0
    %1212 = vmatprep.mubr.f32.mxu0 0.0
    %v1213 = vand.u32 %v551, 4294901760
    %1214 = vmatmul.mubr.f32.gmra.mrb[0].mxu0 %v1213
    %v1215 = vpop.f32.mrb[0].mxu0
    %v1216 = vadd.f32 %v1125, %v1215
    %v1217 = vpop.f32.mrb[0].mxu0
    %1218 = vdwg.mxu0
    %1219 = vmatprep.subr.mxu0 0.0
    %v1220 = vand.u32 %v1038, 4294901760
    %v1221 = vsub.f32 %v1038, %v1220
    %1222 = vmatpush1.msra.mxu0 %v1221
    %1223 = vmatprep.subr.mxu0 0.0
    %v1224 = vand.u32 %v1039, 4294901760
    %v1225 = vsub.f32 %v1039, %v1224
    %1226 = vmatpush1.msra.mxu0 %v1225
    %1227 = vmatprep.subr.mxu0 0.0
    %v1228 = vand.u32 %v1040, 4294901760
    %v1229 = vsub.f32 %v1040, %v1228
    %1230 = vmatpush1.msra.mxu0 %v1229
    %1231 = vmatprep.subr.mxu0 0.0
    %v1232 = vand.u32 %v1041, 4294901760
    %v1233 = vsub.f32 %v1041, %v1232
    %1234 = vmatpush1.msra.mxu0 %v1233
    %1235 = vmatprep.subr.mxu0 0.0
    %1236 = vmatpush1.msra.mxu0 0.0
    %1237 = vmatprep.subr.mxu0 0.0
    %1238 = vmatpush1.msra.mxu0 0.0
    %1239 = vmatprep.subr.mxu0 0.0
    %1240 = vmatpush1.msra.mxu0 0.0
    %1241 = vmatprep.subr.mxu0 0.0
    %1242 = vmatpush1.msra.mxu0 0.0
    %1243 = vmatprep.subr.mxu0 0.0
    %1244 = vmatpush1.msra.mxu0 0.0
    %1245 = vmatprep.subr.mxu0 0.0
    %1246 = vmatpush1.msra.mxu0 0.0
    %1247 = vmatprep.subr.mxu0 0.0
    %1248 = vmatpush1.msra.mxu0 0.0
    %1249 = vmatprep.subr.mxu0 0.0
    %1250 = vmatpush1.msra.mxu0 0.0
    %1251 = vmatprep.subr.mxu0 0.0
    %1252 = vmatpush1.msra.mxu0 0.0
    %1253 = vmatprep.subr.mxu0 0.0
    %1254 = vmatpush1.msra.mxu0 0.0
    %1255 = vmatprep.subr.mxu0 0.0
    %1256 = vmatpush1.msra.mxu0 0.0
    %1257 = vmatprep.subr.mxu0 0.0
    %1258 = vmatpush1.msra.mxu0 0.0
    %1259 = vmatprep.subr.mxu0 0.0
    %1260 = vmatpush1.msra.mxu0 0.0
    %1261 = vmatprep.subr.mxu0 0.0
    %1262 = vmatpush1.msra.mxu0 0.0
    %1263 = vmatprep.subr.mxu0 0.0
    %1264 = vmatpush1.msra.mxu0 0.0
    %1265 = vmatprep.subr.mxu0 0.0
    %1266 = vmatpush1.msra.mxu0 0.0
    %1267 = vmatprep.subr.mxu0 0.0
    %1268 = vmatpush1.msra.mxu0 0.0
    %1269 = vmatprep.subr.mxu0 0.0
    %1270 = vmatpush1.msra.mxu0 0.0
    %1271 = vmatprep.subr.mxu0 0.0
    %1272 = vmatpush1.msra.mxu0 0.0
    %1273 = vmatprep.subr.mxu0 0.0
    %1274 = vmatpush1.msra.mxu0 0.0
    %1275 = vmatprep.subr.mxu0 0.0
    %1276 = vmatpush1.msra.mxu0 0.0
    %1277 = vmatprep.subr.mxu0 0.0
    %1278 = vmatpush1.msra.mxu0 0.0
    %1279 = vmatprep.subr.mxu0 0.0
    %1280 = vmatpush1.msra.mxu0 0.0
    %1281 = vmatprep.subr.mxu0 0.0
    %1282 = vmatpush1.msra.mxu0 0.0
    %1283 = vmatprep.subr.mxu0 0.0
    %1284 = vmatpush1.msra.mxu0 0.0
    %1285 = vmatprep.subr.mxu0 0.0
    %1286 = vmatpush1.msra.mxu0 0.0
    %1287 = vmatprep.subr.mxu0 0.0
    %1288 = vmatpush1.msra.mxu0 0.0
    %1289 = vmatprep.subr.mxu0 0.0
    %1290 = vmatpush1.msra.mxu0 0.0
    %1291 = vmatprep.mubr.f32.mxu0 0.0
    %v1292 = vand.u32 %v551, 4294901760
    %v1293 = vsub.f32 %v551, %v1292
    %1294 = vmatmul.mubr.f32.gmra.mrb[0].mxu0 %v1293
    %v1295 = vpop.f32.mrb[0].mxu0
    %v1296 = vadd.f32 %v1216, %v1295
    %v1297 = vpop.f32.mrb[0].mxu0
    %1298 = vdwg.mxu0
    %1299 = vmatprep.subr.mxu0 0.0
    %v1300 = vand.u32 %v1038, 4294901760
    %1301 = vmatpush1.msra.mxu0 %v1300
    %1302 = vmatprep.subr.mxu0 0.0
    %v1303 = vand.u32 %v1039, 4294901760
    %1304 = vmatpush1.msra.mxu0 %v1303
    %1305 = vmatprep.subr.mxu0 0.0
    %v1306 = vand.u32 %v1040, 4294901760
    %1307 = vmatpush1.msra.mxu0 %v1306
    %1308 = vmatprep.subr.mxu0 0.0
    %v1309 = vand.u32 %v1041, 4294901760
    %1310 = vmatpush1.msra.mxu0 %v1309
    %1311 = vmatprep.subr.mxu0 0.0
    %1312 = vmatpush1.msra.mxu0 0.0
    %1313 = vmatprep.subr.mxu0 0.0
    %1314 = vmatpush1.msra.mxu0 0.0
    %1315 = vmatprep.subr.mxu0 0.0
    %1316 = vmatpush1.msra.mxu0 0.0
    %1317 = vmatprep.subr.mxu0 0.0
    %1318 = vmatpush1.msra.mxu0 0.0
    %1319 = vmatprep.subr.mxu0 0.0
    %1320 = vmatpush1.msra.mxu0 0.0
    %1321 = vmatprep.subr.mxu0 0.0
    %1322 = vmatpush1.msra.mxu0 0.0
    %1323 = vmatprep.subr.mxu0 0.0
    %1324 = vmatpush1.msra.mxu0 0.0
    %1325 = vmatprep.subr.mxu0 0.0
    %1326 = vmatpush1.msra.mxu0 0.0
    %1327 = vmatprep.subr.mxu0 0.0
    %1328 = vmatpush1.msra.mxu0 0.0
    %1329 = vmatprep.subr.mxu0 0.0
    %1330 = vmatpush1.msra.mxu0 0.0
    %1331 = vmatprep.subr.mxu0 0.0
    %1332 = vmatpush1.msra.mxu0 0.0
    %1333 = vmatprep.subr.mxu0 0.0
    %1334 = vmatpush1.msra.mxu0 0.0
    %1335 = vmatprep.subr.mxu0 0.0
    %1336 = vmatpush1.msra.mxu0 0.0
    %1337 = vmatprep.subr.mxu0 0.0
    %1338 = vmatpush1.msra.mxu0 0.0
    %1339 = vmatprep.subr.mxu0 0.0
    %1340 = vmatpush1.msra.mxu0 0.0
    %1341 = vmatprep.subr.mxu0 0.0
    %1342 = vmatpush1.msra.mxu0 0.0
    %1343 = vmatprep.subr.mxu0 0.0
    %1344 = vmatpush1.msra.mxu0 0.0
    %1345 = vmatprep.subr.mxu0 0.0
    %1346 = vmatpush1.msra.mxu0 0.0
    %1347 = vmatprep.subr.mxu0 0.0
    %1348 = vmatpush1.msra.mxu0 0.0
    %1349 = vmatprep.subr.mxu0 0.0
    %1350 = vmatpush1.msra.mxu0 0.0
    %1351 = vmatprep.subr.mxu0 0.0
    %1352 = vmatpush1.msra.mxu0 0.0
    %1353 = vmatprep.subr.mxu0 0.0
    %1354 = vmatpush1.msra.mxu0 0.0
    %1355 = vmatprep.subr.mxu0 0.0
    %1356 = vmatpush1.msra.mxu0 0.0
    %1357 = vmatprep.subr.mxu0 0.0
    %1358 = vmatpush1.msra.mxu0 0.0
    %1359 = vmatprep.subr.mxu0 0.0
    %1360 = vmatpush1.msra.mxu0 0.0
    %1361 = vmatprep.subr.mxu0 0.0
    %1362 = vmatpush1.msra.mxu0 0.0
    %1363 = vmatprep.subr.mxu0 0.0
    %1364 = vmatpush1.msra.mxu0 0.0
    %1365 = vmatprep.subr.mxu0 0.0
    %1366 = vmatpush1.msra.mxu0 0.0
    %1367 = vmatprep.mubr.f32.mxu0 0.0
    %v1368 = vand.u32 %v551, 4294901760
    %v1369 = vsub.f32 %v551, %v1368
    %v1370 = vand.u32 %v1369, 4294901760
    %1371 = vmatmul.mubr.f32.gmra.mrb[0].mxu0 %v1370
    %v1372 = vpop.f32.mrb[0].mxu0
    %v1373 = vadd.f32 %v1296, %v1372
    %v1374 = vpop.f32.mrb[0].mxu0
    %1375 = vdwg.mxu0
    %1376 = vmatprep.subr.mxu0 0.0
    %v1377 = vand.u32 %v1038, 4294901760
    %v1378 = vsub.f32 %v1038, %v1377
    %v1379 = vand.u32 %v1378, 4294901760
    %1380 = vmatpush1.msra.mxu0 %v1379
    %1381 = vmatprep.subr.mxu0 0.0
    %v1382 = vand.u32 %v1039, 4294901760
    %v1383 = vsub.f32 %v1039, %v1382
    %v1384 = vand.u32 %v1383, 4294901760
    %1385 = vmatpush1.msra.mxu0 %v1384
    %1386 = vmatprep.subr.mxu0 0.0
    %v1387 = vand.u32 %v1040, 4294901760
    %v1388 = vsub.f32 %v1040, %v1387
    %v1389 = vand.u32 %v1388, 4294901760
    %1390 = vmatpush1.msra.mxu0 %v1389
    %1391 = vmatprep.subr.mxu0 0.0
    %v1392 = vand.u32 %v1041, 4294901760
    %v1393 = vsub.f32 %v1041, %v1392
    %v1394 = vand.u32 %v1393, 4294901760
    %1395 = vmatpush1.msra.mxu0 %v1394
    %1396 = vmatprep.subr.mxu0 0.0
    %1397 = vmatpush1.msra.mxu0 0.0
    %1398 = vmatprep.subr.mxu0 0.0
    %1399 = vmatpush1.msra.mxu0 0.0
    %1400 = vmatprep.subr.mxu0 0.0
    %1401 = vmatpush1.msra.mxu0 0.0
    %1402 = vmatprep.subr.mxu0 0.0
    %1403 = vmatpush1.msra.mxu0 0.0
    %1404 = vmatprep.subr.mxu0 0.0
    %1405 = vmatpush1.msra.mxu0 0.0
    %1406 = vmatprep.subr.mxu0 0.0
    %1407 = vmatpush1.msra.mxu0 0.0
    %1408 = vmatprep.subr.mxu0 0.0
    %1409 = vmatpush1.msra.mxu0 0.0
    %1410 = vmatprep.subr.mxu0 0.0
    %1411 = vmatpush1.msra.mxu0 0.0
    %1412 = vmatprep.subr.mxu0 0.0
    %1413 = vmatpush1.msra.mxu0 0.0
    %1414 = vmatprep.subr.mxu0 0.0
    %1415 = vmatpush1.msra.mxu0 0.0
    %1416 = vmatprep.subr.mxu0 0.0
    %1417 = vmatpush1.msra.mxu0 0.0
    %1418 = vmatprep.subr.mxu0 0.0
    %1419 = vmatpush1.msra.mxu0 0.0
    %1420 = vmatprep.subr.mxu0 0.0
    %1421 = vmatpush1.msra.mxu0 0.0
    %1422 = vmatprep.subr.mxu0 0.0
    %1423 = vmatpush1.msra.mxu0 0.0
    %1424 = vmatprep.subr.mxu0 0.0
    %1425 = vmatpush1.msra.mxu0 0.0
    %1426 = vmatprep.subr.mxu0 0.0
    %1427 = vmatpush1.msra.mxu0 0.0
    %1428 = vmatprep.subr.mxu0 0.0
    %1429 = vmatpush1.msra.mxu0 0.0
    %1430 = vmatprep.subr.mxu0 0.0
    %1431 = vmatpush1.msra.mxu0 0.0
    %1432 = vmatprep.subr.mxu0 0.0
    %1433 = vmatpush1.msra.mxu0 0.0
    %1434 = vmatprep.subr.mxu0 0.0
    %1435 = vmatpush1.msra.mxu0 0.0
    %1436 = vmatprep.subr.mxu0 0.0
    %1437 = vmatpush1.msra.mxu0 0.0
    %1438 = vmatprep.subr.mxu0 0.0
    %1439 = vmatpush1.msra.mxu0 0.0
    %1440 = vmatprep.subr.mxu0 0.0
    %1441 = vmatpush1.msra.mxu0 0.0
    %1442 = vmatprep.subr.mxu0 0.0
    %1443 = vmatpush1.msra.mxu0 0.0
    %1444 = vmatprep.subr.mxu0 0.0
    %1445 = vmatpush1.msra.mxu0 0.0
    %1446 = vmatprep.subr.mxu0 0.0
    %1447 = vmatpush1.msra.mxu0 0.0
    %1448 = vmatprep.subr.mxu0 0.0
    %1449 = vmatpush1.msra.mxu0 0.0
    %1450 = vmatprep.subr.mxu0 0.0
    %1451 = vmatpush1.msra.mxu0 0.0
    %1452 = vmatprep.mubr.f32.mxu0 0.0
    %v1453 = vand.u32 %v551, 4294901760
    %1454 = vmatmul.mubr.f32.gmra.mrb[0].mxu0 %v1453
    %v1455 = vpop.f32.mrb[0].mxu0
    %v1456 = vadd.f32 %v1373, %v1455
    %v1457 = vpop.f32.mrb[0].mxu0
    %1458 = vdwg.mxu0
    %1459 = vmatprep.subr.mxu0 0.0
    %v1460 = vand.u32 %v1038, 4294901760
    %1461 = vmatpush1.msra.mxu0 %v1460
    %1462 = vmatprep.subr.mxu0 0.0
    %v1463 = vand.u32 %v1039, 4294901760
    %1464 = vmatpush1.msra.mxu0 %v1463
    %1465 = vmatprep.subr.mxu0 0.0
    %v1466 = vand.u32 %v1040, 4294901760
    %1467 = vmatpush1.msra.mxu0 %v1466
    %1468 = vmatprep.subr.mxu0 0.0
    %v1469 = vand.u32 %v1041, 4294901760
    %1470 = vmatpush1.msra.mxu0 %v1469
    %1471 = vmatprep.subr.mxu0 0.0
    %1472 = vmatpush1.msra.mxu0 0.0
    %1473 = vmatprep.subr.mxu0 0.0
    %1474 = vmatpush1.msra.mxu0 0.0
    %1475 = vmatprep.subr.mxu0 0.0
    %1476 = vmatpush1.msra.mxu0 0.0
    %1477 = vmatprep.subr.mxu0 0.0
    %1478 = vmatpush1.msra.mxu0 0.0
    %1479 = vmatprep.subr.mxu0 0.0
    %1480 = vmatpush1.msra.mxu0 0.0
    %1481 = vmatprep.subr.mxu0 0.0
    %1482 = vmatpush1.msra.mxu0 0.0
    %1483 = vmatprep.subr.mxu0 0.0
    %1484 = vmatpush1.msra.mxu0 0.0
    %1485 = vmatprep.subr.mxu0 0.0
    %1486 = vmatpush1.msra.mxu0 0.0
    %1487 = vmatprep.subr.mxu0 0.0
    %1488 = vmatpush1.msra.mxu0 0.0
    %1489 = vmatprep.subr.mxu0 0.0
    %1490 = vmatpush1.msra.mxu0 0.0
    %1491 = vmatprep.subr.mxu0 0.0
    %1492 = vmatpush1.msra.mxu0 0.0
    %1493 = vmatprep.subr.mxu0 0.0
    %1494 = vmatpush1.msra.mxu0 0.0
    %1495 = vmatprep.subr.mxu0 0.0
    %1496 = vmatpush1.msra.mxu0 0.0
    %1497 = vmatprep.subr.mxu0 0.0
    %1498 = vmatpush1.msra.mxu0 0.0
    %1499 = vmatprep.subr.mxu0 0.0
    %1500 = vmatpush1.msra.mxu0 0.0
    %1501 = vmatprep.subr.mxu0 0.0
    %1502 = vmatpush1.msra.mxu0 0.0
    %1503 = vmatprep.subr.mxu0 0.0
    %1504 = vmatpush1.msra.mxu0 0.0
    %1505 = vmatprep.subr.mxu0 0.0
    %1506 = vmatpush1.msra.mxu0 0.0
    %1507 = vmatprep.subr.mxu0 0.0
    %1508 = vmatpush1.msra.mxu0 0.0
    %1509 = vmatprep.subr.mxu0 0.0
    %1510 = vmatpush1.msra.mxu0 0.0
    %1511 = vmatprep.subr.mxu0 0.0
    %1512 = vmatpush1.msra.mxu0 0.0
    %1513 = vmatprep.subr.mxu0 0.0
    %1514 = vmatpush1.msra.mxu0 0.0
    %1515 = vmatprep.subr.mxu0 0.0
    %1516 = vmatpush1.msra.mxu0 0.0
    %1517 = vmatprep.subr.mxu0 0.0
    %1518 = vmatpush1.msra.mxu0 0.0
    %1519 = vmatprep.subr.mxu0 0.0
    %1520 = vmatpush1.msra.mxu0 0.0
    %1521 = vmatprep.subr.mxu0 0.0
    %1522 = vmatpush1.msra.mxu0 0.0
    %1523 = vmatprep.subr.mxu0 0.0
    %1524 = vmatpush1.msra.mxu0 0.0
    %1525 = vmatprep.subr.mxu0 0.0
    %1526 = vmatpush1.msra.mxu0 0.0
    %1527 = vmatprep.mubr.f32.mxu0 0.0
    %v1528 = vand.u32 %v551, 4294901760
    %1529 = vmatmul.mubr.f32.gmra.mrb[0].mxu0 %v1528
    %v1530 = vpop.f32.mrb[0].mxu0
    %v1531 = vadd.f32 %v1456, %v1530
    %v1532 = vpop.f32.mrb[0].mxu0
    %1533 = vdwg.mxu0
    %v1534 = vmul.f32 %v1531, 1.442695
    %v1535 = vpow.pop %v1534
    %vm1536 = vcmask 130048
    %1537 = vst.msk [vmem:[#allocation2] sm:$0xff] %vm1536, %v1035
    %1538 = vst.msk [vmem:[#allocation4] sm:$0xff] %vm1536, %v1535
    // Predicated region
    $region30: #{tpu_custom_call.1} parent=1 // pred_check
      _
    $region31: #{tpu_custom_call.1} parent=1 // pred_check_branch
      %1540 = sbr.rel (0) target = $region33
    $region32: #{tpu_custom_call.1} parent=1 // pred_region
      %s1542 = ssub.s32 128, 128
      %1543 = vsyncadd [#allocation3], %s1542
      %s1545 = sshll.u32 [#allocation2], 4
      %s1546 = int_to_ptr.vmem [resolvable:$true] %s1545
      %1548 = dma.vmem_to_hbm [thread:$0]  %s1546, 128, %s7, [#allocation3]
    $region33: #{tpu_custom_call.1} parent=1 // pred_fallthru
      _
    // Predicated region
    $region34: #{tpu_custom_call.1} parent=1 // pred_check
      _
    $region35: #{tpu_custom_call.1} parent=1 // pred_check_branch
      %1550 = sbr.rel (0) target = $region37
    $region36: #{tpu_custom_call.1} parent=1 // pred_region
      %s1552 = ssub.s32 128, 128
      %1553 = vsyncadd [#allocation5], %s1552
      %s1555 = sshll.u32 [#allocation4], 4
      %s1556 = int_to_ptr.vmem [resolvable:$true] %s1555
      %1558 = dma.vmem_to_hbm [thread:$0]  %s1556, 128, %s8, [#allocation5]
    $region37: #{tpu_custom_call.1} parent=1 // pred_fallthru
      _
    // Predicated region
    $region38: #{tpu_custom_call.1} parent=1 // pred_check
      _
    $region39: #{tpu_custom_call.1} parent=1 // pred_check_branch
      %1560 = sbr.rel (0) target = $region41
    $region40: #{tpu_custom_call.1} parent=1 // pred_region
      %1561 = dma.done [#allocation3], 128
    $region41: #{tpu_custom_call.1} parent=1 // pred_fallthru
      _
    // Predicated region
    $region42: #{tpu_custom_call.1} parent=1 // pred_check
      _
    $region43: #{tpu_custom_call.1} parent=1 // pred_check_branch
      %1563 = sbr.rel (0) target = $region45
    $region44: #{tpu_custom_call.1} parent=1 // pred_region
      %1564 = dma.done [#allocation5], 128
    $region45: #{tpu_custom_call.1} parent=1 // pred_fallthru
      _
    %1565 = vsyncpa [#allocation3], 1
    %1566 = vsyncpa [#allocation5], 1

</llo_original>
